<compile_context>
chip_gen: v5e
topology: v5e:2x2
jax: 0.10.0
libtpu: 0.0.40
codegen_flags: <defaults>
</compile_context>

<pallas_src>
import functools

import jax
import jax.numpy as jnp
from jax.experimental import pallas as pl
from jax.experimental.pallas import tpu as pltpu

LANE = 128      # lane width
SUBLANE = 16    # bf16 sublane packing (rows per packed sublane group)


def _round_up(n, m):
    return ((n + m - 1) // m) * m


def _vae_kernel(*refs, z_dim, h_pad, z_pad, x_pad, mode):
    if mode:
        x_ref, eps_ref, w1_ref, wh_ref, wd1_ref, wd2_ref, b_ref, mlz_ref, xhat_ref = refs
    else:
        x_ref, w1_ref, wh_ref, wd1_ref, wd2_ref, b_ref, mlz_ref, xhat_ref = refs

    f32, bf16 = jnp.float32, jnp.bfloat16

    # Packed bias layout (all segment offsets are multiples of 128):
    #   [ b1 : h_pad | bmu,blv : 2*z_pad | bd1 : h_pad | bd2 : x_pad ]
    o1 = h_pad
    o2 = h_pad + 2 * z_pad
    o3 = 2 * h_pad + 2 * z_pad
    b1 = b_ref[:, :o1]
    bh = b_ref[:, o1:o2]
    bd1 = b_ref[:, o2:o3]
    bd2 = b_ref[:, o3:o3 + x_pad]

    # ---- Encoder: x arrives unpadded f32, cast to bf16 in VMEM ---------------
    x = x_ref[...].astype(bf16)                                     # (TB, x_dim)
    h = jnp.dot(x, w1_ref[...], preferred_element_type=f32) + b1    # (TB, h_pad)
    h = jnp.maximum(h, 0.0).astype(bf16)                            # ReLU

    # Fused mu|logvar head: one matmul with shared LHS (256-wide RHS).
    ml = jnp.dot(h, wh_ref[...], preferred_element_type=f32) + bh   # (TB, 2*z_pad) f32
    mu = ml[:, :z_pad]
    logvar = ml[:, z_pad:]

    # ---- Reparameterize (static mode); only the z_dim valid lanes are used ---
    if mode:
        z = eps_ref[...] * jnp.exp(0.5 * logvar[:, :z_dim]) + mu[:, :z_dim]
    else:
        z = mu[:, :z_dim]                                            # (TB, z_dim)

    # ---- Decoder (K = z_dim on the first matmul; wd1 stored unpadded on rows)
    hd = jnp.dot(z.astype(bf16), wd1_ref[...], preferred_element_type=f32) + bd1
    hd = jnp.maximum(hd, 0.0).astype(bf16)
    logits = jnp.dot(hd, wd2_ref[...], preferred_element_type=f32) + bd2

    # ---- Outputs --------------------------------------------------------------
    # mu|logvar|z packed into a single lane-dense 128-wide block; the column
    # writes below are cheap masked in-VMEM stores, the HBM block stays dense.
    mlz_ref[...] = jnp.zeros_like(mlz_ref)
    mlz_ref[:, 0:z_dim] = mu[:, :z_dim]
    mlz_ref[:, z_dim:2 * z_dim] = logvar[:, :z_dim]
    mlz_ref[:, 2 * z_dim:3 * z_dim] = z
    xhat_ref[...] = jax.nn.sigmoid(logits).astype(xhat_ref.dtype)


def prepare_params(params, x_dim, h_dim, z_dim):
    """One-time padding / packing / bf16 cast of the VAE weights.

    Hoisted out of the per-call path so the padding passes are not re-executed
    on every forward call.
    """
    bf16 = jnp.bfloat16
    h_pad = _round_up(h_dim, LANE)
    z_pad = _round_up(z_dim, LANE)
    x_pad = _round_up(x_dim, LANE)

    w1 = jnp.zeros((x_dim, h_pad), bf16).at[:, :h_dim].set(params["w1"].astype(bf16))
    wh = jnp.zeros((h_pad, 2 * z_pad), bf16)
    wh = wh.at[:h_dim, :z_dim].set(params["wmu"].astype(bf16))
    wh = wh.at[:h_dim, z_pad:z_pad + z_dim].set(params["wlv"].astype(bf16))
    wd1 = jnp.zeros((z_dim, h_pad), bf16).at[:, :h_dim].set(params["wd1"].astype(bf16))
    wd2 = jnp.zeros((h_pad, x_pad), bf16).at[:h_dim, :x_dim].set(params["wd2"].astype(bf16))

    total_b = 2 * h_pad + 2 * z_pad + x_pad
    b = jnp.zeros((1, total_b), jnp.float32)
    b = b.at[0, 0:h_dim].set(params["b1"].reshape(-1))
    b = b.at[0, h_pad:h_pad + z_dim].set(params["bmu"].reshape(-1))
    b = b.at[0, h_pad + z_pad:h_pad + z_pad + z_dim].set(params["blv"].reshape(-1))
    b = b.at[0, h_pad + 2 * z_pad:h_pad + 2 * z_pad + h_dim].set(params["bd1"].reshape(-1))
    b = b.at[0, 2 * h_pad + 2 * z_pad:2 * h_pad + 2 * z_pad + x_dim].set(params["bd2"].reshape(-1))
    return dict(w1=w1, wh=wh, wd1=wd1, wd2=wd2, b=b)


@functools.partial(jax.jit, static_argnames=("x_dim", "h_dim", "z_dim", "mode"))
def vae_forward(x, eps, prepared, *, x_dim, h_dim, z_dim, mode=True):
    """Full VAE forward in one Pallas kernel.

    x:   [B, x_dim] float32
    eps: [B, z_dim] float32 uniform noise (only used when mode=True)
    prepared: output of prepare_params()
    Returns (mu, logvar, z, x_hat) as float32 with the logical shapes.
    """
    B = x.shape[0]
    h_pad = _round_up(h_dim, LANE)
    z_pad = _round_up(z_dim, LANE)
    x_pad = _round_up(x_dim, LANE)
    mlz_w = _round_up(3 * z_dim, LANE)   # packed mu|logvar|z width

    # Batch tile: multiple of 16 rows (clean bf16 sublane packing) and >= 2 grid
    # steps when possible so v7x's two TensorCores both get work and input DMA of
    # step i+1 overlaps output writeback of step i on single-TC v5e/v6e.
    if B >= 512:
        TB = 256
    elif B >= 32:
        TB = _round_up(pl.cdiv(B, 2), SUBLANE)
    else:
        TB = _round_up(max(B, 1), SUBLANE)
    B_pad = _round_up(B, TB)
    grid = (B_pad // TB,)

    if B_pad != B:  # pad batch rows only (feature dims stay logical)
        x = jnp.zeros((B_pad, x_dim), x.dtype).at[:B].set(x)
        if mode:
            eps = jnp.zeros((B_pad, z_dim), eps.dtype).at[:B].set(eps)

    w1, wh, wd1, wd2, b = (prepared[k] for k in ("w1", "wh", "wd1", "wd2", "b"))
    total_b = b.shape[1]

    kernel = functools.partial(
        _vae_kernel, z_dim=z_dim, h_pad=h_pad, z_pad=z_pad, x_pad=x_pad, mode=mode)

    in_specs = [pl.BlockSpec((TB, x_dim), lambda i: (i, 0))]         # x tile (f32, unpadded)
    args = [x]
    if mode:
        in_specs.append(pl.BlockSpec((TB, z_dim), lambda i: (i, 0)))  # eps tile (dropped if mode=False)
        args.append(eps)
    in_specs += [
        pl.BlockSpec((x_dim, h_pad), lambda i: (0, 0)),              # W1 (resident)
        pl.BlockSpec((h_pad, 2 * z_pad), lambda i: (0, 0)),          # Wmu|Wlv fused (resident)
        pl.BlockSpec((z_dim, h_pad), lambda i: (0, 0)),              # Wd1 (resident)
        pl.BlockSpec((h_pad, x_pad), lambda i: (0, 0)),              # Wd2 (resident)
        pl.BlockSpec((1, total_b), lambda i: (0, 0)),                # packed biases
    ]
    args += [w1, wh, wd1, wd2, b]

    # Cost estimate from the *logical* dims (padded dims would mislead XLA).
    flops = 2 * B * (x_dim * h_dim + h_dim * 2 * z_dim + z_dim * h_dim + h_dim * x_dim)
    transcendentals = B * (z_dim + x_dim)                            # exp + sigmoid
    weight_bytes = 2 * (x_dim * h_dim + 2 * h_dim * z_dim + z_dim * h_dim + h_dim * x_dim)
    bytes_accessed = (B * x_dim * 4 + (B * z_dim * 4 if mode else 0) + weight_bytes
                      + total_b * 4 + B * 3 * z_dim * 4 + B * x_dim * 2)

    # VMEM budget: resident weights + double-buffered batch tiles (well under limits).
    tile_bytes = TB * (x_dim * 4 + (z_dim * 4 if mode else 0) + mlz_w * 4 + x_pad * 2)
    weight_vmem = (x_dim * h_pad + h_pad * 2 * z_pad + z_dim * h_pad + h_pad * x_pad) * 2 + total_b * 4
    vmem_limit = int(min(max(4 * (tile_bytes + weight_vmem), 4 << 20), 64 << 20))

    mlz, xhat = pl.pallas_call(
        kernel,
        out_shape=(
            jax.ShapeDtypeStruct((B_pad, mlz_w), jnp.float32),       # mu | logvar | z packed
            jax.ShapeDtypeStruct((B_pad, x_pad), jnp.bfloat16),      # x_hat
        ),
        grid=grid,
        in_specs=in_specs,
        out_specs=(
            pl.BlockSpec((TB, mlz_w), lambda i: (i, 0)),
            pl.BlockSpec((TB, x_pad), lambda i: (i, 0)),
        ),
        compiler_params=pltpu.CompilerParams(
            dimension_semantics=("parallel",),
            vmem_limit_bytes=vmem_limit,
        ),
        cost_estimate=pl.CostEstimate(
            flops=flops, transcendentals=transcendentals, bytes_accessed=bytes_accessed),
    )(*args)

    mu = mlz[:B, 0:z_dim]
    logvar = mlz[:B, z_dim:2 * z_dim]
    z = mlz[:B, 2 * z_dim:3 * z_dim]
    x_hat = xhat[:B, :x_dim].astype(jnp.float32)
    return mu, logvar, z, x_hat


def vae_reference(x, eps, params, mode=True, matmul_dtype=jnp.float32):
    """Pure-JAX reference. matmul_dtype=bf16 mirrors the kernel's mixed precision."""
    def mm(a, w):
        return jnp.dot(a.astype(matmul_dtype), w.astype(matmul_dtype),
                       preferred_element_type=jnp.float32)
    h = jnp.maximum(mm(x, params["w1"]) + params["b1"], 0.0)
    mu = mm(h, params["wmu"]) + params["bmu"]
    logvar = mm(h, params["wlv"]) + params["blv"]
    z = eps * jnp.exp(0.5 * logvar) + mu if mode else mu
    hd = jnp.maximum(mm(z, params["wd1"]) + params["bd1"], 0.0)
    x_hat = jax.nn.sigmoid(mm(hd, params["wd2"]) + params["bd2"])
    return mu, logvar, z, x_hat


def init_params(key, x_dim, h_dim, z_dim):
    """PyTorch-Linear-style init: U(-1/sqrt(fan_in), 1/sqrt(fan_in))."""
    def linear(key, fan_in, fan_out):
        kw, kb = jax.random.split(key)
        bound = 1.0 / jnp.sqrt(jnp.float32(fan_in))
        w = jax.random.uniform(kw, (fan_in, fan_out), jnp.float32, -bound, bound)
        b = jax.random.uniform(kb, (fan_out,), jnp.float32, -bound, bound)
        return w, b

    k1, k2, k3, k4, k5 = jax.random.split(key, 5)
    w1, b1 = linear(k1, x_dim, h_dim)     # encoder hidden
    wmu, bmu = linear(k2, h_dim, z_dim)   # mu head
    wlv, blv = linear(k3, h_dim, z_dim)   # logvar head
    wd1, bd1 = linear(k4, z_dim, h_dim)   # decoder hidden
    wd2, bd2 = linear(k5, h_dim, x_dim)   # decoder output
    return dict(w1=w1, b1=b1, wmu=wmu, bmu=bmu, wlv=wlv, blv=blv,
                wd1=wd1, bd1=bd1, wd2=wd2, bd2=bd2)


if __name__ == "__main__":
    B, X_DIM, H_DIM, Z_DIM = 512, 64, 32, 16   # grid of 2 batch tiles (TB=256)

    root = jax.random.PRNGKey(0)
    k_params, k_x, k_eps = jax.random.split(root, 3)

    params = init_params(k_params, X_DIM, H_DIM, Z_DIM)
    prepared = jax.block_until_ready(prepare_params(params, X_DIM, H_DIM, Z_DIM))

    x = jax.random.uniform(k_x, (B, X_DIM), jnp.float32)       # flattened pixels in [0,1)
    eps = jax.random.uniform(k_eps, (B, Z_DIM), jnp.float32)   # torch.rand_like semantics

    # ---- mode=True ----------------------------------------------------------
    mu, logvar, z, x_hat = vae_forward(
        x, eps, prepared, x_dim=X_DIM, h_dim=H_DIM, z_dim=Z_DIM, mode=True)
    jax.block_until_ready((mu, logvar, z, x_hat))

    assert mu.shape == (B, Z_DIM) and logvar.shape == (B, Z_DIM)
    assert z.shape == (B, Z_DIM) and x_hat.shape == (B, X_DIM)
    assert bool(jnp.all(jnp.isfinite(x_hat)))

    # Tight check against a mixed-precision reference that mirrors the kernel
    # (bf16 matmul inputs, f32 accumulation); x_hat tolerance covers bf16 output.
    mu_m, lv_m, z_m, xh_m = vae_reference(x, eps, params, mode=True, matmul_dtype=jnp.bfloat16)
    for name, got, want, tol in (("mu", mu, mu_m, 5e-3), ("logvar", logvar, lv_m, 5e-3),
                                 ("z", z, z_m, 5e-3), ("x_hat", x_hat, xh_m, 2e-2)):
        err = float(jnp.max(jnp.abs(got - want)))
        assert err < tol, f"{name} max abs err {err}"

    # Looser sanity check against the pure f32 reference (bf16 weights diverge
    # from the f32 PyTorch model by design; this bounds that divergence).
    mu_r, lv_r, z_r, xh_r = vae_reference(x, eps, params, mode=True)
    for got, want in ((mu, mu_r), (logvar, lv_r), (z, z_r), (x_hat, xh_r)):
        err = float(jnp.max(jnp.abs(got - want)))
        assert err < 1e-1, f"f32-reference max abs err {err}"

    # ---- mode=False (eps operand is dropped; decoder runs on mu) -------------
    mu2, lv2, z2, xh2 = vae_forward(
        x, eps, prepared, x_dim=X_DIM, h_dim=H_DIM, z_dim=Z_DIM, mode=False)
    jax.block_until_ready((mu2, lv2, z2, xh2))
    assert float(jnp.max(jnp.abs(z2 - mu2))) == 0.0
    _, _, _, xh2_m = vae_reference(x, eps, params, mode=False, matmul_dtype=jnp.bfloat16)
    assert float(jnp.max(jnp.abs(xh2 - xh2_m))) < 2e-2

    print("KERNEL_OK")
</pallas_src>

<mosaic_0001>
module attributes {stable_mosaic.version = 11 : i64} {
  func.func @_vae_kernel(%arg0: i32, %arg1: memref<256x64xf32, #tpu.memory_space<vmem>>, %arg2: memref<256x16xf32, #tpu.memory_space<vmem>>, %arg3: memref<64x128xbf16, #tpu.memory_space<vmem>>, %arg4: memref<128x256xbf16, #tpu.memory_space<vmem>>, %arg5: memref<16x128xbf16, #tpu.memory_space<vmem>>, %arg6: memref<128x128xbf16, #tpu.memory_space<vmem>>, %arg7: memref<1x640xf32, #tpu.memory_space<vmem>>, %arg8: memref<256x128xf32, #tpu.memory_space<vmem>>, %arg9: memref<256x128xbf16, #tpu.memory_space<vmem>>) attributes {dimension_semantics = [#tpu.dimension_semantics<parallel>], iteration_bounds = array<i64: 2>, scalar_prefetch = 0 : i64, scratch_operands = 0 : i64, tpu.core_type = #tpu.core_type<tc>, window_params = [{transform_indices = @transform_0, window_bounds = array<i64: 256, 64>}, {transform_indices = @transform_1, window_bounds = array<i64: 256, 16>}, {pipeline_mode = #tpu.pipeline_mode<synchronous>, transform_indices = @transform_2, window_bounds = array<i64: 64, 128>}, {pipeline_mode = #tpu.pipeline_mode<synchronous>, transform_indices = @transform_3, window_bounds = array<i64: 128, 256>}, {pipeline_mode = #tpu.pipeline_mode<synchronous>, transform_indices = @transform_4, window_bounds = array<i64: 16, 128>}, {pipeline_mode = #tpu.pipeline_mode<synchronous>, transform_indices = @transform_5, window_bounds = array<i64: 128, 128>}, {pipeline_mode = #tpu.pipeline_mode<synchronous>, transform_indices = @transform_6, window_bounds = array<i64: 1, 640>}, {transform_indices = @transform_7, window_bounds = array<i64: 256, 128>}, {transform_indices = @transform_8, window_bounds = array<i64: 256, 128>}]} {
    %c0 = arith.constant 0 : index
    %c0_0 = arith.constant 0 : index
    %0 = vector.load %arg7[%c0, %c0_0] : memref<1x640xf32, #tpu.memory_space<vmem>>, vector<1x128xf32>
    %c0_1 = arith.constant 0 : index
    %c128 = arith.constant 128 : index
    %1 = vector.load %arg7[%c0_1, %c128] : memref<1x640xf32, #tpu.memory_space<vmem>>, vector<1x256xf32>
    %c0_2 = arith.constant 0 : index
    %c384 = arith.constant 384 : index
    %2 = vector.load %arg7[%c0_2, %c384] : memref<1x640xf32, #tpu.memory_space<vmem>>, vector<1x128xf32>
    %c0_3 = arith.constant 0 : index
    %c512 = arith.constant 512 : index
    %3 = vector.load %arg7[%c0_3, %c512] : memref<1x640xf32, #tpu.memory_space<vmem>>, vector<1x128xf32>
    %c0_4 = arith.constant 0 : index
    %c0_5 = arith.constant 0 : index
    %4 = vector.load %arg1[%c0_4, %c0_5] : memref<256x64xf32, #tpu.memory_space<vmem>>, vector<256x64xf32>
    %5 = arith.truncf %4 : vector<256x64xf32> to vector<256x64xbf16>
    %c0_6 = arith.constant 0 : index
    %c0_7 = arith.constant 0 : index
    %6 = vector.load %arg3[%c0_6, %c0_7] : memref<64x128xbf16, #tpu.memory_space<vmem>>, vector<64x128xbf16>
    %cst = arith.constant dense<0.000000e+00> : vector<256x128xf32>
    %7 = tpu.matmul %5, %6, %cst {dimension_numbers = #tpu.dot_dimension_numbers<[1], [0], [0], [1], [0, 0, 1, 1], [], []>} : vector<256x64xbf16>, vector<64x128xbf16>, vector<256x128xf32> -> vector<256x128xf32>
    %8 = vector.broadcast %0 : vector<1x128xf32> to vector<256x128xf32>
    %9 = arith.addf %7, %8 : vector<256x128xf32>
    %cst_8 = arith.constant 0.000000e+00 : f32
    %10 = vector.broadcast %cst_8 : f32 to vector<256x128xf32>
    %11 = arith.maximumf %9, %10 : vector<256x128xf32>
    %12 = arith.truncf %11 : vector<256x128xf32> to vector<256x128xbf16>
    %c0_9 = arith.constant 0 : index
    %c0_10 = arith.constant 0 : index
    %13 = vector.load %arg4[%c0_9, %c0_10] : memref<128x256xbf16, #tpu.memory_space<vmem>>, vector<128x256xbf16>
    %cst_11 = arith.constant dense<0.000000e+00> : vector<256x256xf32>
    %14 = tpu.matmul %12, %13, %cst_11 {dimension_numbers = #tpu.dot_dimension_numbers<[1], [0], [0], [1], [0, 0, 1, 1], [], []>} : vector<256x128xbf16>, vector<128x256xbf16>, vector<256x256xf32> -> vector<256x256xf32>
    %15 = vector.broadcast %1 : vector<1x256xf32> to vector<256x256xf32>
    %16 = arith.addf %14, %15 : vector<256x256xf32>
    %17 = vector.extract_strided_slice %16 {offsets = [0, 0], sizes = [256, 128], strides = [1, 1]} : vector<256x256xf32> to vector<256x128xf32>
    %18 = vector.extract_strided_slice %16 {offsets = [0, 128], sizes = [256, 128], strides = [1, 1]} : vector<256x256xf32> to vector<256x128xf32>
    %c0_12 = arith.constant 0 : index
    %c0_13 = arith.constant 0 : index
    %19 = vector.load %arg2[%c0_12, %c0_13] : memref<256x16xf32, #tpu.memory_space<vmem>>, vector<256x16xf32>
    %20 = vector.extract_strided_slice %18 {offsets = [0, 0], sizes = [256, 16], strides = [1, 1]} : vector<256x128xf32> to vector<256x16xf32>
    %cst_14 = arith.constant 5.000000e-01 : f32
    %21 = vector.broadcast %cst_14 : f32 to vector<256x16xf32>
    %22 = arith.mulf %21, %20 : vector<256x16xf32>
    %23 = math.exp %22 : vector<256x16xf32>
    %24 = arith.mulf %19, %23 : vector<256x16xf32>
    %25 = vector.extract_strided_slice %17 {offsets = [0, 0], sizes = [256, 16], strides = [1, 1]} : vector<256x128xf32> to vector<256x16xf32>
    %26 = arith.addf %24, %25 : vector<256x16xf32>
    %27 = arith.truncf %26 : vector<256x16xf32> to vector<256x16xbf16>
    %c0_15 = arith.constant 0 : index
    %c0_16 = arith.constant 0 : index
    %28 = vector.load %arg5[%c0_15, %c0_16] : memref<16x128xbf16, #tpu.memory_space<vmem>>, vector<16x128xbf16>
    %cst_17 = arith.constant dense<0.000000e+00> : vector<256x128xf32>
    %29 = tpu.matmul %27, %28, %cst_17 {dimension_numbers = #tpu.dot_dimension_numbers<[1], [0], [0], [1], [0, 0, 1, 1], [], []>} : vector<256x16xbf16>, vector<16x128xbf16>, vector<256x128xf32> -> vector<256x128xf32>
    %30 = vector.broadcast %2 : vector<1x128xf32> to vector<256x128xf32>
    %31 = arith.addf %29, %30 : vector<256x128xf32>
    %cst_18 = arith.constant 0.000000e+00 : f32
    %32 = vector.broadcast %cst_18 : f32 to vector<256x128xf32>
    %33 = arith.maximumf %31, %32 : vector<256x128xf32>
    %34 = arith.truncf %33 : vector<256x128xf32> to vector<256x128xbf16>
    %c0_19 = arith.constant 0 : index
    %c0_20 = arith.constant 0 : index
    %35 = vector.load %arg6[%c0_19, %c0_20] : memref<128x128xbf16, #tpu.memory_space<vmem>>, vector<128x128xbf16>
    %cst_21 = arith.constant dense<0.000000e+00> : vector<256x128xf32>
    %36 = tpu.matmul %34, %35, %cst_21 {dimension_numbers = #tpu.dot_dimension_numbers<[1], [0], [0], [1], [0, 0, 1, 1], [], []>} : vector<256x128xbf16>, vector<128x128xbf16>, vector<256x128xf32> -> vector<256x128xf32>
    %37 = vector.broadcast %3 : vector<1x128xf32> to vector<256x128xf32>
    %38 = arith.addf %36, %37 : vector<256x128xf32>
    %cst_22 = arith.constant 0.000000e+00 : f32
    %39 = vector.broadcast %cst_22 : f32 to vector<256x128xf32>
    %c0_23 = arith.constant 0 : index
    %c0_24 = arith.constant 0 : index
    %40 = vector.load %arg8[%c0_23, %c0_24] : memref<256x128xf32, #tpu.memory_space<vmem>>, vector<256x128xf32>
    tpu.vector_store %arg8[%c0_23, %c0_24], %39 {strides = array<i32>} : memref<256x128xf32, #tpu.memory_space<vmem>>, vector<256x128xf32>,
    %41 = vector.extract_strided_slice %17 {offsets = [0, 0], sizes = [256, 16], strides = [1, 1]} : vector<256x128xf32> to vector<256x16xf32>
    %c0_25 = arith.constant 0 : index
    %c0_26 = arith.constant 0 : index
    %42 = vector.load %arg8[%c0_25, %c0_26] : memref<256x128xf32, #tpu.memory_space<vmem>>, vector<256x16xf32>
    tpu.vector_store %arg8[%c0_25, %c0_26], %41 {strides = array<i32>} : memref<256x128xf32, #tpu.memory_space<vmem>>, vector<256x16xf32>,
    %43 = vector.extract_strided_slice %18 {offsets = [0, 0], sizes = [256, 16], strides = [1, 1]} : vector<256x128xf32> to vector<256x16xf32>
    %c0_27 = arith.constant 0 : index
    %c16 = arith.constant 16 : index
    %44 = vector.load %arg8[%c0_27, %c16] : memref<256x128xf32, #tpu.memory_space<vmem>>, vector<256x16xf32>
    tpu.vector_store %arg8[%c0_27, %c16], %43 {strides = array<i32>} : memref<256x128xf32, #tpu.memory_space<vmem>>, vector<256x16xf32>,
    %c0_28 = arith.constant 0 : index
    %c32 = arith.constant 32 : index
    %45 = vector.load %arg8[%c0_28, %c32] : memref<256x128xf32, #tpu.memory_space<vmem>>, vector<256x16xf32>
    tpu.vector_store %arg8[%c0_28, %c32], %26 {strides = array<i32>} : memref<256x128xf32, #tpu.memory_space<vmem>>, vector<256x16xf32>,
    %46 = arith.negf %38 : vector<256x128xf32>
    %47 = math.exp %46 : vector<256x128xf32>
    %cst_29 = arith.constant 1.000000e+00 : f32
    %48 = vector.broadcast %cst_29 : f32 to vector<256x128xf32>
    %49 = arith.addf %48, %47 : vector<256x128xf32>
    %50 = arith.divf %48, %49 : vector<256x128xf32>
    %51 = arith.truncf %50 : vector<256x128xf32> to vector<256x128xbf16>
    %c0_30 = arith.constant 0 : index
    %c0_31 = arith.constant 0 : index
    %52 = vector.load %arg9[%c0_30, %c0_31] : memref<256x128xbf16, #tpu.memory_space<vmem>>, vector<256x128xbf16>
    tpu.vector_store %arg9[%c0_30, %c0_31], %51 {strides = array<i32>} : memref<256x128xbf16, #tpu.memory_space<vmem>>, vector<256x128xbf16>,
    return
  }
  func.func @transform_0(%arg0: i32) -> (i32, i32) {
    %c0_i32 = arith.constant 0 : i32
    %c0_i32_0 = arith.constant 0 : i32
    return %arg0, %c0_i32 : i32, i32
  }
  func.func @transform_1(%arg0: i32) -> (i32, i32) {
    %c0_i32 = arith.constant 0 : i32
    %c0_i32_0 = arith.constant 0 : i32
    return %arg0, %c0_i32 : i32, i32
  }
  func.func @transform_2(%arg0: i32) -> (i32, i32) {
    %c0_i32 = arith.constant 0 : i32
    %c0_i32_0 = arith.constant 0 : i32
    %c0_i32_1 = arith.constant 0 : i32
    return %c0_i32, %c0_i32_0 : i32, i32
  }
  func.func @transform_3(%arg0: i32) -> (i32, i32) {
    %c0_i32 = arith.constant 0 : i32
    %c0_i32_0 = arith.constant 0 : i32
    %c0_i32_1 = arith.constant 0 : i32
    return %c0_i32, %c0_i32_0 : i32, i32
  }
  func.func @transform_4(%arg0: i32) -> (i32, i32) {
    %c0_i32 = arith.constant 0 : i32
    %c0_i32_0 = arith.constant 0 : i32
    %c0_i32_1 = arith.constant 0 : i32
    return %c0_i32, %c0_i32_0 : i32, i32
  }
  func.func @transform_5(%arg0: i32) -> (i32, i32) {
    %c0_i32 = arith.constant 0 : i32
    %c0_i32_0 = arith.constant 0 : i32
    %c0_i32_1 = arith.constant 0 : i32
    return %c0_i32, %c0_i32_0 : i32, i32
  }
  func.func @transform_6(%arg0: i32) -> (i32, i32) {
    %c0_i32 = arith.constant 0 : i32
    %c0_i32_0 = arith.constant 0 : i32
    %c0_i32_1 = arith.constant 0 : i32
    return %c0_i32, %c0_i32_0 : i32, i32
  }
  func.func @transform_7(%arg0: i32) -> (i32, i32) {
    %c0_i32 = arith.constant 0 : i32
    %c0_i32_0 = arith.constant 0 : i32
    return %arg0, %c0_i32 : i32, i32
  }
  func.func @transform_8(%arg0: i32) -> (i32, i32) {
    %c0_i32 = arith.constant 0 : i32
    %c0_i32_0 = arith.constant 0 : i32
    return %arg0, %c0_i32 : i32, i32
  }
}

</mosaic_0001>

<llo_original>
// kernel: vae_forward.1
$region0: #{vae_forward.1}
  #allocation0 [shape = 'u32[]', space=smem, size = 0x4, offset = 0x4, fixed_abs, tag = 'smem constant byte address 0x4 - core index']
  #allocation1 [shape = 'u32[72,128]{1,0:T(1,128)}', space=vmem, size = 0x9000, scoped, tag = 'internal scratch']
  %s0 = inlined_call_operand.vmem [shape: f32[512,64], index: 0, kind: input, shape index: {}]
  %s1 = inlined_call_operand.vmem [shape: f32[512,16], index: 1, kind: input, shape index: {}]
  %s2 = inlined_call_operand.vmem [shape: bf16[64,128], index: 2, kind: input, shape index: {}]
  %s3 = inlined_call_operand.vmem [shape: bf16[128,256], index: 3, kind: input, shape index: {}]
  %s4 = inlined_call_operand.vmem [shape: bf16[16,128], index: 4, kind: input, shape index: {}]
  %s5 = inlined_call_operand.vmem [shape: bf16[128,128], index: 5, kind: input, shape index: {}]
  %s6 = inlined_call_operand.vmem [shape: f32[1,640], index: 6, kind: input, shape index: {}]
  %s7 = inlined_call_operand.vmem [shape: f32[512,128], index: 7, kind: output, shape index: {0}]
  %s8 = inlined_call_operand.vmem [shape: bf16[512,128], index: 8, kind: output, shape index: {1}]
  %9 = xla_tuple %s7, %s8
  %s10 = sld [smem:[#allocation0]]
  $region69: #{vae_forward.1} parent=0
    _
  %s12 = ssub.s32 1, %s10
  %s13 = scalar_select 0, %s12, %s10
  loop: start=0, step=1, limit=4
  $region2: #{vae_forward.1} parent=0 // loop_pre_header
    _
  $region3: #{vae_forward.1} parent=0 // loop_header
    %s15 = sphi 0, %s19
    %p16 = scmp.ge.s32.totalorder %s15, 4
    %s25 = sphi 0, %s27
    %s28 = sphi 0, %s25
    %s29 = sphi 0, %s28
    %s45 = sphi 0, %s29
    %s51 = sphi 0, %s53
    %s54 = sphi 0, %s51
    %s55 = sphi 0, %s54
    %s71 = sphi 0, %s55
    %s75 = sphi 0, %s75
    %s77 = sphi 0, %s75
    %s78 = sphi 0, %s77
    %s92 = sphi 0, %s78
    %s96 = sphi 0, %s96
    %s98 = sphi 0, %s96
    %s99 = sphi 0, %s98
    %s113 = sphi 0, %s99
    %s117 = sphi 0, %s117
    %s119 = sphi 0, %s117
    %s120 = sphi 0, %s119
    %s134 = sphi 0, %s120
    %s138 = sphi 0, %s138
    %s140 = sphi 0, %s138
    %s141 = sphi 0, %s140
    %s155 = sphi 0, %s141
    %s159 = sphi 0, %s159
    %s161 = sphi 0, %s159
    %s162 = sphi 0, %s161
    %s176 = sphi 0, %s162
    %s182 = sphi 0, %s184
    %s185 = sphi 0, %s182
    %s186 = sphi 0, %s185
    %s202 = sphi 0, %s186
    %s208 = sphi 0, %s210
    %s211 = sphi 0, %s208
    %s212 = sphi 0, %s211
    %s228 = sphi 0, %s212
  $region4: #{vae_forward.1} parent=0 // loop_header_branch
    %18 = sbr.rel (%p16) target = $region8
  $region5: #{vae_forward.1} parent=0 // loop_body
    %s20 = ssub.s32 %s15, 1
    %s21 = ssub.s32 %s15, 2
    %s22 = sadd.s32 %s15, 1
    %s23 = ssub.s32 %s15, %s22
    %p24 = scmp.eq.s32.totalorder %s23, 0
    %s26 = sadd.s32 %s25, 1
    %s27 = scalar_select %p24, %s25, %s26
    %p30 = pneg %p24
    %p31 = scmp.eq.s32.totalorder %s15, 1
    %p32 = por %p30, %p31
    %p33 = scmp.ne.s32.totalorder %s25, %s28
    %p34 = scmp.eq.s32.totalorder %s15, 0
    %p35 = por %p33, %p34
    %p36 = scmp.ne.s32.totalorder %s25, %s28
    %p37 = scmp.eq.s32.totalorder %s20, 1
    %p38 = por %p36, %p37
    %p39 = scmp.ne.s32.totalorder %s28, %s29
    %p40 = scmp.eq.s32.totalorder %s20, 0
    %p41 = por %p39, %p40
    %p42 = scmp.ne.s32.totalorder %s28, %s29
    %p43 = scmp.eq.s32.totalorder %s21, 1
    %p44 = por %p42, %p43
    %p46 = scmp.ne.s32.totalorder %s29, %s45
    %p47 = scmp.eq.s32.totalorder %s21, 0
    %p48 = por %p46, %p47
    %s49 = ssub.s32 %s15, %s22
    %p50 = scmp.eq.s32.totalorder %s49, 0
    %s52 = sadd.s32 %s51, 1
    %s53 = scalar_select %p50, %s51, %s52
    %p56 = pneg %p50
    %p57 = scmp.eq.s32.totalorder %s15, 1
    %p58 = por %p56, %p57
    %p59 = scmp.ne.s32.totalorder %s51, %s54
    %p60 = scmp.eq.s32.totalorder %s15, 0
    %p61 = por %p59, %p60
    %p62 = scmp.ne.s32.totalorder %s51, %s54
    %p63 = scmp.eq.s32.totalorder %s20, 1
    %p64 = por %p62, %p63
    %p65 = scmp.ne.s32.totalorder %s54, %s55
    %p66 = scmp.eq.s32.totalorder %s20, 0
    %p67 = por %p65, %p66
    %p68 = scmp.ne.s32.totalorder %s54, %s55
    %p69 = scmp.eq.s32.totalorder %s21, 1
    %p70 = por %p68, %p69
    %p72 = scmp.ne.s32.totalorder %s55, %s71
    %p73 = scmp.eq.s32.totalorder %s21, 0
    %p74 = por %p72, %p73
    %s76 = sadd.s32 %s75, 1
    %p79 = scmp.eq.s32.totalorder %s15, 1
    %p80 = scmp.ne.s32.totalorder %s75, %s77
    %p81 = scmp.eq.s32.totalorder %s15, 0
    %p82 = por %p80, %p81
    %p83 = scmp.ne.s32.totalorder %s75, %s77
    %p84 = scmp.eq.s32.totalorder %s20, 1
    %p85 = por %p83, %p84
    %p86 = scmp.ne.s32.totalorder %s77, %s78
    %p87 = scmp.eq.s32.totalorder %s20, 0
    %p88 = por %p86, %p87
    %p89 = scmp.ne.s32.totalorder %s77, %s78
    %p90 = scmp.eq.s32.totalorder %s21, 1
    %p91 = por %p89, %p90
    %p93 = scmp.ne.s32.totalorder %s78, %s92
    %p94 = scmp.eq.s32.totalorder %s21, 0
    %p95 = por %p93, %p94
    %s97 = sadd.s32 %s96, 1
    %p100 = scmp.eq.s32.totalorder %s15, 1
    %p101 = scmp.ne.s32.totalorder %s96, %s98
    %p102 = scmp.eq.s32.totalorder %s15, 0
    %p103 = por %p101, %p102
    %p104 = scmp.ne.s32.totalorder %s96, %s98
    %p105 = scmp.eq.s32.totalorder %s20, 1
    %p106 = por %p104, %p105
    %p107 = scmp.ne.s32.totalorder %s98, %s99
    %p108 = scmp.eq.s32.totalorder %s20, 0
    %p109 = por %p107, %p108
    %p110 = scmp.ne.s32.totalorder %s98, %s99
    %p111 = scmp.eq.s32.totalorder %s21, 1
    %p112 = por %p110, %p111
    %p114 = scmp.ne.s32.totalorder %s99, %s113
    %p115 = scmp.eq.s32.totalorder %s21, 0
    %p116 = por %p114, %p115
    %s118 = sadd.s32 %s117, 1
    %p121 = scmp.eq.s32.totalorder %s15, 1
    %p122 = scmp.ne.s32.totalorder %s117, %s119
    %p123 = scmp.eq.s32.totalorder %s15, 0
    %p124 = por %p122, %p123
    %p125 = scmp.ne.s32.totalorder %s117, %s119
    %p126 = scmp.eq.s32.totalorder %s20, 1
    %p127 = por %p125, %p126
    %p128 = scmp.ne.s32.totalorder %s119, %s120
    %p129 = scmp.eq.s32.totalorder %s20, 0
    %p130 = por %p128, %p129
    %p131 = scmp.ne.s32.totalorder %s119, %s120
    %p132 = scmp.eq.s32.totalorder %s21, 1
    %p133 = por %p131, %p132
    %p135 = scmp.ne.s32.totalorder %s120, %s134
    %p136 = scmp.eq.s32.totalorder %s21, 0
    %p137 = por %p135, %p136
    %s139 = sadd.s32 %s138, 1
    %p142 = scmp.eq.s32.totalorder %s15, 1
    %p143 = scmp.ne.s32.totalorder %s138, %s140
    %p144 = scmp.eq.s32.totalorder %s15, 0
    %p145 = por %p143, %p144
    %p146 = scmp.ne.s32.totalorder %s138, %s140
    %p147 = scmp.eq.s32.totalorder %s20, 1
    %p148 = por %p146, %p147
    %p149 = scmp.ne.s32.totalorder %s140, %s141
    %p150 = scmp.eq.s32.totalorder %s20, 0
    %p151 = por %p149, %p150
    %p152 = scmp.ne.s32.totalorder %s140, %s141
    %p153 = scmp.eq.s32.totalorder %s21, 1
    %p154 = por %p152, %p153
    %p156 = scmp.ne.s32.totalorder %s141, %s155
    %p157 = scmp.eq.s32.totalorder %s21, 0
    %p158 = por %p156, %p157
    %s160 = sadd.s32 %s159, 1
    %p163 = scmp.eq.s32.totalorder %s15, 1
    %p164 = scmp.ne.s32.totalorder %s159, %s161
    %p165 = scmp.eq.s32.totalorder %s15, 0
    %p166 = por %p164, %p165
    %p167 = scmp.ne.s32.totalorder %s159, %s161
    %p168 = scmp.eq.s32.totalorder %s20, 1
    %p169 = por %p167, %p168
    %p170 = scmp.ne.s32.totalorder %s161, %s162
    %p171 = scmp.eq.s32.totalorder %s20, 0
    %p172 = por %p170, %p171
    %p173 = scmp.ne.s32.totalorder %s161, %s162
    %p174 = scmp.eq.s32.totalorder %s21, 1
    %p175 = por %p173, %p174
    %p177 = scmp.ne.s32.totalorder %s162, %s176
    %p178 = scmp.eq.s32.totalorder %s21, 0
    %p179 = por %p177, %p178
    %s180 = ssub.s32 %s15, %s22
    %p181 = scmp.eq.s32.totalorder %s180, 0
    %s183 = sadd.s32 %s182, 1
    %s184 = scalar_select %p181, %s182, %s183
    %p187 = pneg %p181
    %p188 = scmp.eq.s32.totalorder %s15, 1
    %p189 = por %p187, %p188
    %p190 = scmp.ne.s32.totalorder %s182, %s185
    %p191 = scmp.eq.s32.totalorder %s15, 0
    %p192 = por %p190, %p191
    %p193 = scmp.ne.s32.totalorder %s182, %s185
    %p194 = scmp.eq.s32.totalorder %s20, 1
    %p195 = por %p193, %p194
    %p196 = scmp.ne.s32.totalorder %s185, %s186
    %p197 = scmp.eq.s32.totalorder %s20, 0
    %p198 = por %p196, %p197
    %p199 = scmp.ne.s32.totalorder %s185, %s186
    %p200 = scmp.eq.s32.totalorder %s21, 1
    %p201 = por %p199, %p200
    %p203 = scmp.ne.s32.totalorder %s186, %s202
    %p204 = scmp.eq.s32.totalorder %s21, 0
    %p205 = por %p203, %p204
    %s206 = ssub.s32 %s15, %s22
    %p207 = scmp.eq.s32.totalorder %s206, 0
    %s209 = sadd.s32 %s208, 1
    %s210 = scalar_select %p207, %s208, %s209
    %p213 = pneg %p207
    %p214 = scmp.eq.s32.totalorder %s15, 1
    %p215 = por %p213, %p214
    %p216 = scmp.ne.s32.totalorder %s208, %s211
    %p217 = scmp.eq.s32.totalorder %s15, 0
    %p218 = por %p216, %p217
    %p219 = scmp.ne.s32.totalorder %s208, %s211
    %p220 = scmp.eq.s32.totalorder %s20, 1
    %p221 = por %p219, %p220
    %p222 = scmp.ne.s32.totalorder %s211, %s212
    %p223 = scmp.eq.s32.totalorder %s20, 0
    %p224 = por %p222, %p223
    %p225 = scmp.ne.s32.totalorder %s211, %s212
    %p226 = scmp.eq.s32.totalorder %s21, 1
    %p227 = por %p225, %p226
    %p229 = scmp.ne.s32.totalorder %s212, %s228
    %p230 = scmp.eq.s32.totalorder %s21, 0
    %p231 = por %p229, %p230
    %p232 = scmp.le.s32.totalorder 1, %s15
    %p233 = scmp.lt.s32.totalorder %s15, 3
    %p234 = pnand %p232, %p233
    %p235 = pneg %p234
    // Predicated region
    $region9: #{vae_forward.1} parent=5 // pred_check
      _
    $region10: #{vae_forward.1} parent=5 // pred_check_branch
      %237 = sbr.rel (%p234) target = $region12
    $region11: #{vae_forward.1} parent=5 // pred_region
      %s238 = ssub.s32 %s15, 1
      // Predicated region
      $region13: #{vae_forward.1} parent=11 // pred_check
        %p239 = pneg %p88
      $region14: #{vae_forward.1} parent=11 // pred_check_branch
        %241 = sbr.rel (%p239) target = $region16
      $region15: #{vae_forward.1} parent=11 // pred_region
        _
      $region16: #{vae_forward.1} parent=11 // pred_fallthru
        _
      // Predicated region
      $region17: #{vae_forward.1} parent=11 // pred_check
        %p242 = pneg %p109
      $region18: #{vae_forward.1} parent=11 // pred_check_branch
        %244 = sbr.rel (%p242) target = $region20
      $region19: #{vae_forward.1} parent=11 // pred_region
        _
      $region20: #{vae_forward.1} parent=11 // pred_fallthru
        _
      // Predicated region
      $region21: #{vae_forward.1} parent=11 // pred_check
        %p245 = pneg %p130
      $region22: #{vae_forward.1} parent=11 // pred_check_branch
        %247 = sbr.rel (%p245) target = $region24
      $region23: #{vae_forward.1} parent=11 // pred_region
        _
      $region24: #{vae_forward.1} parent=11 // pred_fallthru
        _
      // Predicated region
      $region25: #{vae_forward.1} parent=11 // pred_check
        %p248 = pneg %p151
      $region26: #{vae_forward.1} parent=11 // pred_check_branch
        %250 = sbr.rel (%p248) target = $region28
      $region27: #{vae_forward.1} parent=11 // pred_region
        _
      $region28: #{vae_forward.1} parent=11 // pred_fallthru
        _
      // Predicated region
      $region29: #{vae_forward.1} parent=11 // pred_check
        %p251 = pneg %p172
      $region30: #{vae_forward.1} parent=11 // pred_check_branch
        %253 = sbr.rel (%p251) target = $region32
      $region31: #{vae_forward.1} parent=11 // pred_region
        _
      $region32: #{vae_forward.1} parent=11 // pred_fallthru
        _
    $region12: #{vae_forward.1} parent=5 // pred_fallthru
      _
    %p254 = scmp.lt.s32.totalorder %s15, 2
    // Predicated region
    $region33: #{vae_forward.1} parent=5 // pred_check
      %p255 = pneg %p254
    $region34: #{vae_forward.1} parent=5 // pred_check_branch
      %257 = sbr.rel (%p255) target = $region36
    $region35: #{vae_forward.1} parent=5 // pred_region
      // Predicated region
      $region37: #{vae_forward.1} parent=35 // pred_check
        %p258 = pneg %p35
      $region38: #{vae_forward.1} parent=35 // pred_check_branch
        %260 = sbr.rel (%p258) target = $region40
      $region39: #{vae_forward.1} parent=35 // pred_region
        %s261 = smul.u32 32, %s15
        %p262 = scmp.lt.s32.totalorder %s261, 63
        %s263 = scalar_select %p262, %s261, 63
        %s264 = smul.addr %s263, 8
        %s265 = scalar_lea.vmem %s0, %s264
        %s266 = smul.u32 32, %s15
      $region40: #{vae_forward.1} parent=35 // pred_fallthru
        _
      // Predicated region
      $region41: #{vae_forward.1} parent=35 // pred_check
        %p267 = pneg %p61
      $region42: #{vae_forward.1} parent=35 // pred_check_branch
        %269 = sbr.rel (%p267) target = $region44
      $region43: #{vae_forward.1} parent=35 // pred_region
        %s270 = smul.u32 32, %s15
        %p271 = scmp.lt.s32.totalorder %s270, 63
        %s272 = scalar_select %p271, %s270, 63
        %s273 = smul.addr %s272, 8
        %s274 = scalar_lea.vmem %s1, %s273
        %s275 = smul.u32 32, %s15
      $region44: #{vae_forward.1} parent=35 // pred_fallthru
        _
    $region36: #{vae_forward.1} parent=5 // pred_fallthru
      _
    %p276 = scmp.le.s32.totalorder 1, %s15
    %p277 = scmp.lt.s32.totalorder %s15, 3
    %p278 = pnand %p276, %p277
    %p279 = pneg %p278
    // Predicated region
    $region45: #{vae_forward.1} parent=5 // pred_check
      _
    $region46: #{vae_forward.1} parent=5 // pred_check_branch
      %281 = sbr.rel (%p278) target = $region48
    $region47: #{vae_forward.1} parent=5 // pred_region
      %s282 = ssub.s32 %s15, 1
      %s283 = smul.u32 32, %s20
      %p284 = scmp.lt.s32.totalorder %s283, 63
      %s285 = scalar_select %p284, %s283, 63
      %s286 = smul.addr %s285, 8
      %s287 = scalar_lea.vmem %s0, %s286
      %p288 = pneg %p41
      %p289 = pneg %p38
      %s290 = smul.u32 32, %s20
      %p291 = scmp.lt.s32.totalorder %s290, 63
      %s292 = scalar_select %p291, %s290, 63
      %s293 = smul.addr %s292, 8
      %s294 = scalar_lea.vmem %s1, %s293
      %p295 = pneg %p67
      %p296 = pneg %p64
      %p297 = pneg %p88
      %p298 = pneg %p85
      %p299 = pneg %p109
      %p300 = pneg %p106
      %p301 = pneg %p130
      %p302 = pneg %p127
      %p303 = pneg %p151
      %p304 = pneg %p148
      %p305 = pneg %p172
      %p306 = pneg %p169
      %p307 = pneg %p198
      %p308 = pneg %p195
      %s309 = smul.u32 32, %s20
      %p310 = scmp.lt.s32.totalorder %s309, 63
      %s311 = scalar_select %p310, %s309, 63
      %s312 = smul.addr %s311, 8
      %s313 = scalar_lea.vmem %s7, %s312
      %p314 = pneg %p224
      %p315 = pneg %p221
      %s316 = smul.u32 32, %s20
      %p317 = scmp.lt.s32.totalorder %s316, 63
      %s318 = scalar_select %p317, %s316, 63
      %s319 = smul.addr %s318, 4
      %s320 = scalar_lea.vmem %s8, %s319
      %s321 = smul.u32 32, %s20
      %p322 = scmp.lt.s32.totalorder %s321, 63
      %s323 = scalar_select %p322, %s321, 63
      %s324 = smul.addr %s323, 8
      %s325 = scalar_lea.vmem %s0, %s324
      %s326 = smul.u32 32, %s20
      %s327 = smul.u32 32, %s20
      %p328 = scmp.lt.s32.totalorder %s327, 63
      %s329 = scalar_select %p328, %s327, 63
      %s330 = smul.addr %s329, 8
      %s331 = scalar_lea.vmem %s1, %s330
      %s332 = smul.u32 32, %s20
      %s333 = smul.u32 32, %s20
      %p334 = scmp.lt.s32.totalorder %s333, 63
      %s335 = scalar_select %p334, %s333, 63
      %s336 = smul.addr %s335, 8
      %s337 = scalar_lea.vmem %s7, %s336
      %s338 = smul.u32 32, %s20
      %s339 = smul.u32 32, %s20
      %p340 = scmp.lt.s32.totalorder %s339, 63
      %s341 = scalar_select %p340, %s339, 63
      %s342 = smul.addr %s341, 4
      %s343 = scalar_lea.vmem %s8, %s342
      %s344 = smul.u32 32, %s20
      %v346 = vld [vmem:[%s6] sm:$0x1]
      %v347 = vld [vmem:[%s6 + $0x1] sm:$0x3]
      %v348 = vld [vmem:[%s6 + $0x3] sm:$0x1]
      %v349 = vld [vmem:[%s6 + $0x4] sm:$0x1]
      %v350 = vld [vmem:[%s325] sm:$0xff]
      %v351 = vld [vmem:[%s325 + $0x8] sm:$0xff]
      %v352 = vld [vmem:[%s325 + $0x10] sm:$0xff]
      %v353 = vld [vmem:[%s325 + $0x18] sm:$0xff]
      %v354 = vld [vmem:[%s325 + $0x20] sm:$0xff]
      %v355 = vld [vmem:[%s325 + $0x28] sm:$0xff]
      %v356 = vld [vmem:[%s325 + $0x30] sm:$0xff]
      %v357 = vld [vmem:[%s325 + $0x38] sm:$0xff]
      %v358 = vld [vmem:[%s325 + $0x40] sm:$0xff]
      %v359 = vld [vmem:[%s325 + $0x48] sm:$0xff]
      %v360 = vld [vmem:[%s325 + $0x50] sm:$0xff]
      %v361 = vld [vmem:[%s325 + $0x58] sm:$0xff]
      %v362 = vld [vmem:[%s325 + $0x60] sm:$0xff]
      %v363 = vld [vmem:[%s325 + $0x68] sm:$0xff]
      %v364 = vld [vmem:[%s325 + $0x70] sm:$0xff]
      %v365 = vld [vmem:[%s325 + $0x78] sm:$0xff]
      %v366 = vld [vmem:[%s325 + $0x80] sm:$0xff]
      %v367 = vld [vmem:[%s325 + $0x88] sm:$0xff]
      %v368 = vld [vmem:[%s325 + $0x90] sm:$0xff]
      %v369 = vld [vmem:[%s325 + $0x98] sm:$0xff]
      %v370 = vld [vmem:[%s325 + $0xa0] sm:$0xff]
      %v371 = vld [vmem:[%s325 + $0xa8] sm:$0xff]
      %v372 = vld [vmem:[%s325 + $0xb0] sm:$0xff]
      %v373 = vld [vmem:[%s325 + $0xb8] sm:$0xff]
      %v374 = vld [vmem:[%s325 + $0xc0] sm:$0xff]
      %v375 = vld [vmem:[%s325 + $0xc8] sm:$0xff]
      %v376 = vld [vmem:[%s325 + $0xd0] sm:$0xff]
      %v377 = vld [vmem:[%s325 + $0xd8] sm:$0xff]
      %v378 = vld [vmem:[%s325 + $0xe0] sm:$0xff]
      %v379 = vld [vmem:[%s325 + $0xe8] sm:$0xff]
      %v380 = vld [vmem:[%s325 + $0xf0] sm:$0xff]
      %v381 = vld [vmem:[%s325 + $0xf8] sm:$0xff]
      %v382 = vpack.c.bf16 %v351, %v350
      %v383 = vpack.c.bf16 %v353, %v352
      %v384 = vpack.c.bf16 %v355, %v354
      %v385 = vpack.c.bf16 %v357, %v356
      %v386 = vpack.c.bf16 %v359, %v358
      %v387 = vpack.c.bf16 %v361, %v360
      %v388 = vpack.c.bf16 %v363, %v362
      %v389 = vpack.c.bf16 %v365, %v364
      %v390 = vpack.c.bf16 %v367, %v366
      %v391 = vpack.c.bf16 %v369, %v368
      %v392 = vpack.c.bf16 %v371, %v370
      %v393 = vpack.c.bf16 %v373, %v372
      %v394 = vpack.c.bf16 %v375, %v374
      %v395 = vpack.c.bf16 %v377, %v376
      %v396 = vpack.c.bf16 %v379, %v378
      %v397 = vpack.c.bf16 %v381, %v380
      %v398 = vld [vmem:[%s2] sm:$0xf]
      %v399 = vld [vmem:[%s2 + $0x4] sm:$0xf]
      %v400 = vld [vmem:[%s2 + $0x8] sm:$0xf]
      %v401 = vld [vmem:[%s2 + $0xc] sm:$0xf]
      %v402 = vld [vmem:[%s2 + $0x10] sm:$0xf]
      %v403 = vld [vmem:[%s2 + $0x14] sm:$0xf]
      %v404 = vld [vmem:[%s2 + $0x18] sm:$0xf]
      %v405 = vld [vmem:[%s2 + $0x1c] sm:$0xf]
      %v407 = vperm.slane %v346, 0
      %v417 = vunpack.c.l.b16 %v398
      %v418 = vunpack.c.l.b16 %v399
      %v419 = vunpack.c.l.b16 %v400
      %v420 = vunpack.c.l.b16 %v401
      %v421 = vunpack.c.l.b16 %v402
      %v422 = vunpack.c.l.b16 %v403
      %v423 = vunpack.c.l.b16 %v404
      %v424 = vunpack.c.l.b16 %v405
      %v425 = vpack.c.b16 %v418, %v417
      %v426 = vpack.c.b16 %v420, %v419
      %v427 = vpack.c.b16 %v422, %v421
      %v428 = vpack.c.b16 %v424, %v423
      %vm433 = vcmask 523264
      %v435 = vsel %vm433, %v382, 0
      %v438 = vsel %vm433, %v383, 0
      %v441 = vsel %vm433, %v384, 0
      %v444 = vsel %vm433, %v385, 0
      %v447 = vsel %vm433, %v386, 0
      %v450 = vsel %vm433, %v387, 0
      %v453 = vsel %vm433, %v388, 0
      %v456 = vsel %vm433, %v389, 0
      %v459 = vsel %vm433, %v390, 0
      %v462 = vsel %vm433, %v391, 0
      %v465 = vsel %vm433, %v392, 0
      %v468 = vsel %vm433, %v393, 0
      %v471 = vsel %vm433, %v394, 0
      %v474 = vsel %vm433, %v395, 0
      %v477 = vsel %vm433, %v396, 0
      %v480 = vsel %vm433, %v397, 0
      %482 = vmatpush.bf16.msra.mxu0 0
      %483 = vmatpush.bf16.msra.mxu0 0
      %484 = vmatpush.bf16.msra.mxu0 0
      %485 = vmatpush.bf16.msra.mxu0 0
      %486 = vmatpush.bf16.msra.mxu0 %v428
      %487 = vmatpush.bf16.msra.mxu0 %v427
      %488 = vmatpush.bf16.msra.mxu0 %v426
      %489 = vmatpush.bf16.msra.mxu0 %v425
      %490 = vmatmul.bf16.gmra.mxu0 %v435
      %v491 = vpop.f32.mrf.mxu0
      %v492 = vadd.f32 %v407, %v491
      %v493 = vpop.f32.mrf.mxu0
      %v494 = vadd.f32 %v407, %v493
      %495 = vmatmul.bf16.gmra.mxu0 %v438
      %v496 = vpop.f32.mrf.mxu0
      %v497 = vadd.f32 %v407, %v496
      %v498 = vpop.f32.mrf.mxu0
      %v499 = vadd.f32 %v407, %v498
      %500 = vmatmul.bf16.gmra.mxu0 %v441
      %v501 = vpop.f32.mrf.mxu0
      %v502 = vadd.f32 %v407, %v501
      %v503 = vpop.f32.mrf.mxu0
      %v504 = vadd.f32 %v407, %v503
      %505 = vmatmul.bf16.gmra.mxu0 %v444
      %v506 = vpop.f32.mrf.mxu0
      %v507 = vadd.f32 %v407, %v506
      %v508 = vpop.f32.mrf.mxu0
      %v509 = vadd.f32 %v407, %v508
      %510 = vmatmul.bf16.gmra.mxu0 %v447
      %v511 = vpop.f32.mrf.mxu0
      %v512 = vadd.f32 %v407, %v511
      %v513 = vpop.f32.mrf.mxu0
      %v514 = vadd.f32 %v407, %v513
      %515 = vmatmul.bf16.gmra.mxu0 %v450
      %v516 = vpop.f32.mrf.mxu0
      %v517 = vadd.f32 %v407, %v516
      %v518 = vpop.f32.mrf.mxu0
      %v519 = vadd.f32 %v407, %v518
      %520 = vmatmul.bf16.gmra.mxu0 %v453
      %v521 = vpop.f32.mrf.mxu0
      %v522 = vadd.f32 %v407, %v521
      %v523 = vpop.f32.mrf.mxu0
      %v524 = vadd.f32 %v407, %v523
      %525 = vmatmul.bf16.gmra.mxu0 %v456
      %v526 = vpop.f32.mrf.mxu0
      %v527 = vadd.f32 %v407, %v526
      %v528 = vpop.f32.mrf.mxu0
      %v529 = vadd.f32 %v407, %v528
      %530 = vmatmul.bf16.gmra.mxu0 %v459
      %v531 = vpop.f32.mrf.mxu0
      %v532 = vadd.f32 %v407, %v531
      %v533 = vpop.f32.mrf.mxu0
      %v534 = vadd.f32 %v407, %v533
      %535 = vmatmul.bf16.gmra.mxu0 %v462
      %v536 = vpop.f32.mrf.mxu0
      %v537 = vadd.f32 %v407, %v536
      %v538 = vpop.f32.mrf.mxu0
      %v539 = vadd.f32 %v407, %v538
      %540 = vmatmul.bf16.gmra.mxu0 %v465
      %v541 = vpop.f32.mrf.mxu0
      %v542 = vadd.f32 %v407, %v541
      %v543 = vpop.f32.mrf.mxu0
      %v544 = vadd.f32 %v407, %v543
      %545 = vmatmul.bf16.gmra.mxu0 %v468
      %v546 = vpop.f32.mrf.mxu0
      %v547 = vadd.f32 %v407, %v546
      %v548 = vpop.f32.mrf.mxu0
      %v549 = vadd.f32 %v407, %v548
      %550 = vmatmul.bf16.gmra.mxu0 %v471
      %v551 = vpop.f32.mrf.mxu0
      %v552 = vadd.f32 %v407, %v551
      %v553 = vpop.f32.mrf.mxu0
      %v554 = vadd.f32 %v407, %v553
      %555 = vmatmul.bf16.gmra.mxu0 %v474
      %v556 = vpop.f32.mrf.mxu0
      %v557 = vadd.f32 %v407, %v556
      %v558 = vpop.f32.mrf.mxu0
      %v559 = vadd.f32 %v407, %v558
      %560 = vmatmul.bf16.gmra.mxu0 %v477
      %v561 = vpop.f32.mrf.mxu0
      %v562 = vadd.f32 %v407, %v561
      %v563 = vpop.f32.mrf.mxu0
      %v564 = vadd.f32 %v407, %v563
      %565 = vmatmul.bf16.gmra.mxu0 %v480
      %v566 = vpop.f32.mrf.mxu0
      %v567 = vadd.f32 %v407, %v566
      %v568 = vpop.f32.mrf.mxu0
      %v569 = vadd.f32 %v407, %v568
      %570 = vdwg.mxu0
      %v571 = vmax.f32 %v492, 0.0
      %v572 = vmax.f32 %v494, 0.0
      %v573 = vmax.f32 %v497, 0.0
      %v574 = vmax.f32 %v499, 0.0
      %v575 = vmax.f32 %v502, 0.0
      %v576 = vmax.f32 %v504, 0.0
      %v577 = vmax.f32 %v507, 0.0
      %v578 = vmax.f32 %v509, 0.0
      %v579 = vmax.f32 %v512, 0.0
      %v580 = vmax.f32 %v514, 0.0
      %v581 = vmax.f32 %v517, 0.0
      %v582 = vmax.f32 %v519, 0.0
      %v583 = vmax.f32 %v522, 0.0
      %v584 = vmax.f32 %v524, 0.0
      %v585 = vmax.f32 %v527, 0.0
      %v586 = vmax.f32 %v529, 0.0
      %v587 = vmax.f32 %v532, 0.0
      %v588 = vmax.f32 %v534, 0.0
      %v589 = vmax.f32 %v537, 0.0
      %v590 = vmax.f32 %v539, 0.0
      %v591 = vmax.f32 %v542, 0.0
      %v592 = vmax.f32 %v544, 0.0
      %v593 = vmax.f32 %v547, 0.0
      %v594 = vmax.f32 %v549, 0.0
      %v595 = vmax.f32 %v552, 0.0
      %v596 = vmax.f32 %v554, 0.0
      %v597 = vmax.f32 %v557, 0.0
      %v598 = vmax.f32 %v559, 0.0
      %v599 = vmax.f32 %v562, 0.0
      %v600 = vmax.f32 %v564, 0.0
      %v601 = vmax.f32 %v567, 0.0
      %v602 = vmax.f32 %v569, 0.0
      %v603 = vpack.c.bf16 %v572, %v571
      %v604 = vpack.c.bf16 %v574, %v573
      %v605 = vpack.c.bf16 %v576, %v575
      %v606 = vpack.c.bf16 %v578, %v577
      %v607 = vpack.c.bf16 %v580, %v579
      %v608 = vpack.c.bf16 %v582, %v581
      %v609 = vpack.c.bf16 %v584, %v583
      %v610 = vpack.c.bf16 %v586, %v585
      %v611 = vpack.c.bf16 %v588, %v587
      %v612 = vpack.c.bf16 %v590, %v589
      %v613 = vpack.c.bf16 %v592, %v591
      %v614 = vpack.c.bf16 %v594, %v593
      %v615 = vpack.c.bf16 %v596, %v595
      %v616 = vpack.c.bf16 %v598, %v597
      %v617 = vpack.c.bf16 %v600, %v599
      %v618 = vpack.c.bf16 %v602, %v601
      %v619 = vld [vmem:[%s3] sm:$0xff]
      %v620 = vld [vmem:[%s3 + $0x8] sm:$0xff]
      %v621 = vld [vmem:[%s3 + $0x10] sm:$0xff]
      %v622 = vld [vmem:[%s3 + $0x18] sm:$0xff]
      %v623 = vld [vmem:[%s3 + $0x20] sm:$0xff]
      %v624 = vld [vmem:[%s3 + $0x28] sm:$0xff]
      %v625 = vld [vmem:[%s3 + $0x30] sm:$0xff]
      %v626 = vld [vmem:[%s3 + $0x38] sm:$0xff]
      %v627 = vld [vmem:[%s3 + $0x40] sm:$0xff]
      %v628 = vld [vmem:[%s3 + $0x48] sm:$0xff]
      %v629 = vld [vmem:[%s3 + $0x50] sm:$0xff]
      %v630 = vld [vmem:[%s3 + $0x58] sm:$0xff]
      %v631 = vld [vmem:[%s3 + $0x60] sm:$0xff]
      %v632 = vld [vmem:[%s3 + $0x68] sm:$0xff]
      %v633 = vld [vmem:[%s3 + $0x70] sm:$0xff]
      %v634 = vld [vmem:[%s3 + $0x78] sm:$0xff]
      %v636 = vperm.slane %v347, 0
      %v637 = vperm.slane %v347, 1
      %v656 = vunpack.c.l.b16 %v619
      %v657 = vunpack.c.h.b16 %v619
      %v658 = vunpack.c.l.b16 %v620
      %v659 = vunpack.c.h.b16 %v620
      %v660 = vunpack.c.l.b16 %v621
      %v661 = vunpack.c.h.b16 %v621
      %v662 = vunpack.c.l.b16 %v622
      %v663 = vunpack.c.h.b16 %v622
      %v664 = vunpack.c.l.b16 %v623
      %v665 = vunpack.c.h.b16 %v623
      %v666 = vunpack.c.l.b16 %v624
      %v667 = vunpack.c.h.b16 %v624
      %v668 = vunpack.c.l.b16 %v625
      %v669 = vunpack.c.h.b16 %v625
      %v670 = vunpack.c.l.b16 %v626
      %v671 = vunpack.c.h.b16 %v626
      %v672 = vunpack.c.l.b16 %v627
      %v673 = vunpack.c.h.b16 %v627
      %v674 = vunpack.c.l.b16 %v628
      %v675 = vunpack.c.h.b16 %v628
      %v676 = vunpack.c.l.b16 %v629
      %v677 = vunpack.c.h.b16 %v629
      %v678 = vunpack.c.l.b16 %v630
      %v679 = vunpack.c.h.b16 %v630
      %v680 = vunpack.c.l.b16 %v631
      %v681 = vunpack.c.h.b16 %v631
      %v682 = vunpack.c.l.b16 %v632
      %v683 = vunpack.c.h.b16 %v632
      %v684 = vunpack.c.l.b16 %v633
      %v685 = vunpack.c.h.b16 %v633
      %v686 = vunpack.c.l.b16 %v634
      %v687 = vunpack.c.h.b16 %v634
      %v688 = vpack.c.b16 %v658, %v656
      %v689 = vpack.c.b16 %v659, %v657
      %v690 = vpack.c.b16 %v662, %v660
      %v691 = vpack.c.b16 %v663, %v661
      %v692 = vpack.c.b16 %v666, %v664
      %v693 = vpack.c.b16 %v667, %v665
      %v694 = vpack.c.b16 %v670, %v668
      %v695 = vpack.c.b16 %v671, %v669
      %v696 = vpack.c.b16 %v674, %v672
      %v697 = vpack.c.b16 %v675, %v673
      %v698 = vpack.c.b16 %v678, %v676
      %v699 = vpack.c.b16 %v679, %v677
      %v700 = vpack.c.b16 %v682, %v680
      %v701 = vpack.c.b16 %v683, %v681
      %v702 = vpack.c.b16 %v686, %v684
      %v703 = vpack.c.b16 %v687, %v685
      %720 = vmatpush.bf16.msra.mxu0 %v702
      %721 = vmatpush.bf16.msra.mxu0 %v700
      %722 = vmatpush.bf16.msra.mxu0 %v698
      %723 = vmatpush.bf16.msra.mxu0 %v696
      %724 = vmatpush.bf16.msra.mxu0 %v694
      %725 = vmatpush.bf16.msra.mxu0 %v692
      %726 = vmatpush.bf16.msra.mxu0 %v690
      %727 = vmatpush.bf16.msra.mxu0 %v688
      %728 = vmatmul.bf16.gmra.mxu0 %v603
      %v729 = vpop.f32.mrf.mxu0
      %v730 = vadd.f32 %v636, %v729
      %v731 = vpop.f32.mrf.mxu0
      %v732 = vadd.f32 %v636, %v731
      %733 = vmatmul.bf16.gmra.mxu0 %v604
      %v734 = vpop.f32.mrf.mxu0
      %v735 = vadd.f32 %v636, %v734
      %v736 = vpop.f32.mrf.mxu0
      %v737 = vadd.f32 %v636, %v736
      %738 = vmatmul.bf16.gmra.mxu0 %v605
      %v739 = vpop.f32.mrf.mxu0
      %v740 = vadd.f32 %v636, %v739
      %v741 = vpop.f32.mrf.mxu0
      %v742 = vadd.f32 %v636, %v741
      %743 = vmatmul.bf16.gmra.mxu0 %v606
      %v744 = vpop.f32.mrf.mxu0
      %v745 = vadd.f32 %v636, %v744
      %v746 = vpop.f32.mrf.mxu0
      %v747 = vadd.f32 %v636, %v746
      %748 = vmatmul.bf16.gmra.mxu0 %v607
      %v749 = vpop.f32.mrf.mxu0
      %v750 = vadd.f32 %v636, %v749
      %v751 = vpop.f32.mrf.mxu0
      %v752 = vadd.f32 %v636, %v751
      %753 = vmatmul.bf16.gmra.mxu0 %v608
      %v754 = vpop.f32.mrf.mxu0
      %v755 = vadd.f32 %v636, %v754
      %v756 = vpop.f32.mrf.mxu0
      %v757 = vadd.f32 %v636, %v756
      %758 = vmatmul.bf16.gmra.mxu0 %v609
      %v759 = vpop.f32.mrf.mxu0
      %v760 = vadd.f32 %v636, %v759
      %v761 = vpop.f32.mrf.mxu0
      %v762 = vadd.f32 %v636, %v761
      %763 = vmatmul.bf16.gmra.mxu0 %v610
      %v764 = vpop.f32.mrf.mxu0
      %v765 = vadd.f32 %v636, %v764
      %v766 = vpop.f32.mrf.mxu0
      %v767 = vadd.f32 %v636, %v766
      %768 = vmatmul.bf16.gmra.mxu0 %v611
      %v769 = vpop.f32.mrf.mxu0
      %v770 = vadd.f32 %v636, %v769
      %v771 = vpop.f32.mrf.mxu0
      %v772 = vadd.f32 %v636, %v771
      %773 = vmatmul.bf16.gmra.mxu0 %v612
      %v774 = vpop.f32.mrf.mxu0
      %v775 = vadd.f32 %v636, %v774
      %v776 = vpop.f32.mrf.mxu0
      %v777 = vadd.f32 %v636, %v776
      %778 = vmatmul.bf16.gmra.mxu0 %v613
      %v779 = vpop.f32.mrf.mxu0
      %v780 = vadd.f32 %v636, %v779
      %v781 = vpop.f32.mrf.mxu0
      %v782 = vadd.f32 %v636, %v781
      %783 = vmatmul.bf16.gmra.mxu0 %v614
      %v784 = vpop.f32.mrf.mxu0
      %v785 = vadd.f32 %v636, %v784
      %v786 = vpop.f32.mrf.mxu0
      %v787 = vadd.f32 %v636, %v786
      %788 = vmatmul.bf16.gmra.mxu0 %v615
      %v789 = vpop.f32.mrf.mxu0
      %v790 = vadd.f32 %v636, %v789
      %v791 = vpop.f32.mrf.mxu0
      %v792 = vadd.f32 %v636, %v791
      %793 = vmatmul.bf16.gmra.mxu0 %v616
      %v794 = vpop.f32.mrf.mxu0
      %v795 = vadd.f32 %v636, %v794
      %v796 = vpop.f32.mrf.mxu0
      %v797 = vadd.f32 %v636, %v796
      %798 = vmatmul.bf16.gmra.mxu0 %v617
      %v799 = vpop.f32.mrf.mxu0
      %v800 = vadd.f32 %v636, %v799
      %v801 = vpop.f32.mrf.mxu0
      %v802 = vadd.f32 %v636, %v801
      %803 = vmatmul.bf16.gmra.mxu0 %v618
      %v804 = vpop.f32.mrf.mxu0
      %v805 = vadd.f32 %v636, %v804
      %v806 = vpop.f32.mrf.mxu0
      %v807 = vadd.f32 %v636, %v806
      %808 = vdwg.mxu0
      %809 = vmatpush.bf16.msra.mxu0 %v703
      %810 = vmatpush.bf16.msra.mxu0 %v701
      %811 = vmatpush.bf16.msra.mxu0 %v699
      %812 = vmatpush.bf16.msra.mxu0 %v697
      %813 = vmatpush.bf16.msra.mxu0 %v695
      %814 = vmatpush.bf16.msra.mxu0 %v693
      %815 = vmatpush.bf16.msra.mxu0 %v691
      %816 = vmatpush.bf16.msra.mxu0 %v689
      %817 = vmatmul.bf16.gmra.mxu0 %v603
      %v818 = vpop.f32.mrf.mxu0
      %v819 = vadd.f32 %v637, %v818
      %v820 = vpop.f32.mrf.mxu0
      %v821 = vadd.f32 %v637, %v820
      %822 = vmatmul.bf16.gmra.mxu0 %v604
      %v823 = vpop.f32.mrf.mxu0
      %v824 = vadd.f32 %v637, %v823
      %v825 = vpop.f32.mrf.mxu0
      %v826 = vadd.f32 %v637, %v825
      %827 = vmatmul.bf16.gmra.mxu0 %v605
      %v828 = vpop.f32.mrf.mxu0
      %v829 = vadd.f32 %v637, %v828
      %v830 = vpop.f32.mrf.mxu0
      %v831 = vadd.f32 %v637, %v830
      %832 = vmatmul.bf16.gmra.mxu0 %v606
      %v833 = vpop.f32.mrf.mxu0
      %v834 = vadd.f32 %v637, %v833
      %v835 = vpop.f32.mrf.mxu0
      %v836 = vadd.f32 %v637, %v835
      %837 = vmatmul.bf16.gmra.mxu0 %v607
      %v838 = vpop.f32.mrf.mxu0
      %v839 = vadd.f32 %v637, %v838
      %v840 = vpop.f32.mrf.mxu0
      %v841 = vadd.f32 %v637, %v840
      %842 = vmatmul.bf16.gmra.mxu0 %v608
      %v843 = vpop.f32.mrf.mxu0
      %v844 = vadd.f32 %v637, %v843
      %v845 = vpop.f32.mrf.mxu0
      %v846 = vadd.f32 %v637, %v845
      %847 = vmatmul.bf16.gmra.mxu0 %v609
      %v848 = vpop.f32.mrf.mxu0
      %v849 = vadd.f32 %v637, %v848
      %v850 = vpop.f32.mrf.mxu0
      %v851 = vadd.f32 %v637, %v850
      %852 = vmatmul.bf16.gmra.mxu0 %v610
      %v853 = vpop.f32.mrf.mxu0
      %v854 = vadd.f32 %v637, %v853
      %v855 = vpop.f32.mrf.mxu0
      %v856 = vadd.f32 %v637, %v855
      %857 = vmatmul.bf16.gmra.mxu0 %v611
      %v858 = vpop.f32.mrf.mxu0
      %v859 = vadd.f32 %v637, %v858
      %v860 = vpop.f32.mrf.mxu0
      %v861 = vadd.f32 %v637, %v860
      %862 = vmatmul.bf16.gmra.mxu0 %v612
      %v863 = vpop.f32.mrf.mxu0
      %v864 = vadd.f32 %v637, %v863
      %v865 = vpop.f32.mrf.mxu0
      %v866 = vadd.f32 %v637, %v865
      %867 = vmatmul.bf16.gmra.mxu0 %v613
      %v868 = vpop.f32.mrf.mxu0
      %v869 = vadd.f32 %v637, %v868
      %v870 = vpop.f32.mrf.mxu0
      %v871 = vadd.f32 %v637, %v870
      %872 = vmatmul.bf16.gmra.mxu0 %v614
      %v873 = vpop.f32.mrf.mxu0
      %v874 = vadd.f32 %v637, %v873
      %v875 = vpop.f32.mrf.mxu0
      %v876 = vadd.f32 %v637, %v875
      %877 = vmatmul.bf16.gmra.mxu0 %v615
      %v878 = vpop.f32.mrf.mxu0
      %v879 = vadd.f32 %v637, %v878
      %v880 = vpop.f32.mrf.mxu0
      %v881 = vadd.f32 %v637, %v880
      %882 = vmatmul.bf16.gmra.mxu0 %v616
      %v883 = vpop.f32.mrf.mxu0
      %v884 = vadd.f32 %v637, %v883
      %v885 = vpop.f32.mrf.mxu0
      %v886 = vadd.f32 %v637, %v885
      %887 = vmatmul.bf16.gmra.mxu0 %v617
      %v888 = vpop.f32.mrf.mxu0
      %v889 = vadd.f32 %v637, %v888
      %v890 = vpop.f32.mrf.mxu0
      %v891 = vadd.f32 %v637, %v890
      %892 = vmatmul.bf16.gmra.mxu0 %v618
      %v893 = vpop.f32.mrf.mxu0
      %v894 = vadd.f32 %v637, %v893
      %v895 = vpop.f32.mrf.mxu0
      %v896 = vadd.f32 %v637, %v895
      %897 = vdwg.mxu0
      %v898 = vld [vmem:[%s331] sm:$0xff]
      %v899 = vld [vmem:[%s331 + $0x8] sm:$0xff]
      %v900 = vld [vmem:[%s331 + $0x10] sm:$0xff]
      %v901 = vld [vmem:[%s331 + $0x18] sm:$0xff]
      %v902 = vld [vmem:[%s331 + $0x20] sm:$0xff]
      %v903 = vld [vmem:[%s331 + $0x28] sm:$0xff]
      %v904 = vld [vmem:[%s331 + $0x30] sm:$0xff]
      %v905 = vld [vmem:[%s331 + $0x38] sm:$0xff]
      %v906 = vld [vmem:[%s331 + $0x40] sm:$0xff]
      %v907 = vld [vmem:[%s331 + $0x48] sm:$0xff]
      %v908 = vld [vmem:[%s331 + $0x50] sm:$0xff]
      %v909 = vld [vmem:[%s331 + $0x58] sm:$0xff]
      %v910 = vld [vmem:[%s331 + $0x60] sm:$0xff]
      %v911 = vld [vmem:[%s331 + $0x68] sm:$0xff]
      %v912 = vld [vmem:[%s331 + $0x70] sm:$0xff]
      %v913 = vld [vmem:[%s331 + $0x78] sm:$0xff]
      %v914 = vld [vmem:[%s331 + $0x80] sm:$0xff]
      %v915 = vld [vmem:[%s331 + $0x88] sm:$0xff]
      %v916 = vld [vmem:[%s331 + $0x90] sm:$0xff]
      %v917 = vld [vmem:[%s331 + $0x98] sm:$0xff]
      %v918 = vld [vmem:[%s331 + $0xa0] sm:$0xff]
      %v919 = vld [vmem:[%s331 + $0xa8] sm:$0xff]
      %v920 = vld [vmem:[%s331 + $0xb0] sm:$0xff]
      %v921 = vld [vmem:[%s331 + $0xb8] sm:$0xff]
      %v922 = vld [vmem:[%s331 + $0xc0] sm:$0xff]
      %v923 = vld [vmem:[%s331 + $0xc8] sm:$0xff]
      %v924 = vld [vmem:[%s331 + $0xd0] sm:$0xff]
      %v925 = vld [vmem:[%s331 + $0xd8] sm:$0xff]
      %v926 = vld [vmem:[%s331 + $0xe0] sm:$0xff]
      %v927 = vld [vmem:[%s331 + $0xe8] sm:$0xff]
      %v928 = vld [vmem:[%s331 + $0xf0] sm:$0xff]
      %v929 = vld [vmem:[%s331 + $0xf8] sm:$0xff]
      %v930 = vmul.f32 %v819, 0.5
      %v931 = vmul.f32 %v821, 0.5
      %v932 = vmul.f32 %v824, 0.5
      %v933 = vmul.f32 %v826, 0.5
      %v934 = vmul.f32 %v829, 0.5
      %v935 = vmul.f32 %v831, 0.5
      %v936 = vmul.f32 %v834, 0.5
      %v937 = vmul.f32 %v836, 0.5
      %v938 = vmul.f32 %v839, 0.5
      %v939 = vmul.f32 %v841, 0.5
      %v940 = vmul.f32 %v844, 0.5
      %v941 = vmul.f32 %v846, 0.5
      %v942 = vmul.f32 %v849, 0.5
      %v943 = vmul.f32 %v851, 0.5
      %v944 = vmul.f32 %v854, 0.5
      %v945 = vmul.f32 %v856, 0.5
      %v946 = vmul.f32 %v859, 0.5
      %v947 = vmul.f32 %v861, 0.5
      %v948 = vmul.f32 %v864, 0.5
      %v949 = vmul.f32 %v866, 0.5
      %v950 = vmul.f32 %v869, 0.5
      %v951 = vmul.f32 %v871, 0.5
      %v952 = vmul.f32 %v874, 0.5
      %v953 = vmul.f32 %v876, 0.5
      %v954 = vmul.f32 %v879, 0.5
      %v955 = vmul.f32 %v881, 0.5
      %v956 = vmul.f32 %v884, 0.5
      %v957 = vmul.f32 %v886, 0.5
      %v958 = vmul.f32 %v889, 0.5
      %v959 = vmul.f32 %v891, 0.5
      %v960 = vmul.f32 %v894, 0.5
      %v961 = vmul.f32 %v896, 0.5
      %v962 = vmul.f32 %v930, 1.442695
      %v963 = vpow.pop %v962
      %v964 = vmul.f32 %v931, 1.442695
      %v965 = vpow.pop %v964
      %v966 = vmul.f32 %v932, 1.442695
      %v967 = vpow.pop %v966
      %v968 = vmul.f32 %v933, 1.442695
      %v969 = vpow.pop %v968
      %v970 = vmul.f32 %v934, 1.442695
      %v971 = vpow.pop %v970
      %v972 = vmul.f32 %v935, 1.442695
      %v973 = vpow.pop %v972
      %v974 = vmul.f32 %v936, 1.442695
      %v975 = vpow.pop %v974
      %v976 = vmul.f32 %v937, 1.442695
      %v977 = vpow.pop %v976
      %v978 = vmul.f32 %v938, 1.442695
      %v979 = vpow.pop %v978
      %v980 = vmul.f32 %v939, 1.442695
      %v981 = vpow.pop %v980
      %v982 = vmul.f32 %v940, 1.442695
      %v983 = vpow.pop %v982
      %v984 = vmul.f32 %v941, 1.442695
      %v985 = vpow.pop %v984
      %v986 = vmul.f32 %v942, 1.442695
      %v987 = vpow.pop %v986
      %v988 = vmul.f32 %v943, 1.442695
      %v989 = vpow.pop %v988
      %v990 = vmul.f32 %v944, 1.442695
      %v991 = vpow.pop %v990
      %v992 = vmul.f32 %v945, 1.442695
      %v993 = vpow.pop %v992
      %v994 = vmul.f32 %v946, 1.442695
      %v995 = vpow.pop %v994
      %v996 = vmul.f32 %v947, 1.442695
      %v997 = vpow.pop %v996
      %v998 = vmul.f32 %v948, 1.442695
      %v999 = vpow.pop %v998
      %v1000 = vmul.f32 %v949, 1.442695
      %v1001 = vpow.pop %v1000
      %v1002 = vmul.f32 %v950, 1.442695
      %v1003 = vpow.pop %v1002
      %v1004 = vmul.f32 %v951, 1.442695
      %v1005 = vpow.pop %v1004
      %v1006 = vmul.f32 %v952, 1.442695
      %v1007 = vpow.pop %v1006
      %v1008 = vmul.f32 %v953, 1.442695
      %v1009 = vpow.pop %v1008
      %v1010 = vmul.f32 %v954, 1.442695
      %v1011 = vpow.pop %v1010
      %v1012 = vmul.f32 %v955, 1.442695
      %v1013 = vpow.pop %v1012
      %v1014 = vmul.f32 %v956, 1.442695
      %v1015 = vpow.pop %v1014
      %v1016 = vmul.f32 %v957, 1.442695
      %v1017 = vpow.pop %v1016
      %v1018 = vmul.f32 %v958, 1.442695
      %v1019 = vpow.pop %v1018
      %v1020 = vmul.f32 %v959, 1.442695
      %v1021 = vpow.pop %v1020
      %v1022 = vmul.f32 %v960, 1.442695
      %v1023 = vpow.pop %v1022
      %v1024 = vmul.f32 %v961, 1.442695
      %v1025 = vpow.pop %v1024
      %v1026 = vmul.f32 %v898, %v963
      %v1027 = vmul.f32 %v899, %v965
      %v1028 = vmul.f32 %v900, %v967
      %v1029 = vmul.f32 %v901, %v969
      %v1030 = vmul.f32 %v902, %v971
      %v1031 = vmul.f32 %v903, %v973
      %v1032 = vmul.f32 %v904, %v975
      %v1033 = vmul.f32 %v905, %v977
      %v1034 = vmul.f32 %v906, %v979
      %v1035 = vmul.f32 %v907, %v981
      %v1036 = vmul.f32 %v908, %v983
      %v1037 = vmul.f32 %v909, %v985
      %v1038 = vmul.f32 %v910, %v987
      %v1039 = vmul.f32 %v911, %v989
      %v1040 = vmul.f32 %v912, %v991
      %v1041 = vmul.f32 %v913, %v993
      %v1042 = vmul.f32 %v914, %v995
      %v1043 = vmul.f32 %v915, %v997
      %v1044 = vmul.f32 %v916, %v999
      %v1045 = vmul.f32 %v917, %v1001
      %v1046 = vmul.f32 %v918, %v1003
      %v1047 = vmul.f32 %v919, %v1005
      %v1048 = vmul.f32 %v920, %v1007
      %v1049 = vmul.f32 %v921, %v1009
      %v1050 = vmul.f32 %v922, %v1011
      %v1051 = vmul.f32 %v923, %v1013
      %v1052 = vmul.f32 %v924, %v1015
      %v1053 = vmul.f32 %v925, %v1017
      %v1054 = vmul.f32 %v926, %v1019
      %v1055 = vmul.f32 %v927, %v1021
      %v1056 = vmul.f32 %v928, %v1023
      %v1057 = vmul.f32 %v929, %v1025
      %v1058 = vadd.f32 %v1026, %v730
      %v1059 = vadd.f32 %v1027, %v732
      %v1060 = vadd.f32 %v1028, %v735
      %v1061 = vadd.f32 %v1029, %v737
      %v1062 = vadd.f32 %v1030, %v740
      %v1063 = vadd.f32 %v1031, %v742
      %v1064 = vadd.f32 %v1032, %v745
      %v1065 = vadd.f32 %v1033, %v747
      %v1066 = vadd.f32 %v1034, %v750
      %v1067 = vadd.f32 %v1035, %v752
      %v1068 = vadd.f32 %v1036, %v755
      %v1069 = vadd.f32 %v1037, %v757
      %v1070 = vadd.f32 %v1038, %v760
      %v1071 = vadd.f32 %v1039, %v762
      %v1072 = vadd.f32 %v1040, %v765
      %v1073 = vadd.f32 %v1041, %v767
      %v1074 = vadd.f32 %v1042, %v770
      %v1075 = vadd.f32 %v1043, %v772
      %v1076 = vadd.f32 %v1044, %v775
      %v1077 = vadd.f32 %v1045, %v777
      %v1078 = vadd.f32 %v1046, %v780
      %v1079 = vadd.f32 %v1047, %v782
      %v1080 = vadd.f32 %v1048, %v785
      %v1081 = vadd.f32 %v1049, %v787
      %v1082 = vadd.f32 %v1050, %v790
      %v1083 = vadd.f32 %v1051, %v792
      %v1084 = vadd.f32 %v1052, %v795
      %v1085 = vadd.f32 %v1053, %v797
      %v1086 = vadd.f32 %v1054, %v800
      %v1087 = vadd.f32 %v1055, %v802
      %v1088 = vadd.f32 %v1056, %v805
      %v1089 = vadd.f32 %v1057, %v807
      %v1090 = vpack.c.bf16 %v1059, %v1058
      %v1091 = vpack.c.bf16 %v1061, %v1060
      %v1092 = vpack.c.bf16 %v1063, %v1062
      %v1093 = vpack.c.bf16 %v1065, %v1064
      %v1094 = vpack.c.bf16 %v1067, %v1066
      %v1095 = vpack.c.bf16 %v1069, %v1068
      %v1096 = vpack.c.bf16 %v1071, %v1070
      %v1097 = vpack.c.bf16 %v1073, %v1072
      %v1098 = vpack.c.bf16 %v1075, %v1074
      %v1099 = vpack.c.bf16 %v1077, %v1076
      %v1100 = vpack.c.bf16 %v1079, %v1078
      %v1101 = vpack.c.bf16 %v1081, %v1080
      %v1102 = vpack.c.bf16 %v1083, %v1082
      %v1103 = vpack.c.bf16 %v1085, %v1084
      %v1104 = vpack.c.bf16 %v1087, %v1086
      %v1105 = vpack.c.bf16 %v1089, %v1088
      %v1106 = vld [vmem:[%s4] sm:$0xf]
      %v1107 = vld [vmem:[%s4 + $0x4] sm:$0xf]
      %v1109 = vperm.slane %v348, 0
      %v1113 = vunpack.c.l.b16 %v1106
      %v1114 = vunpack.c.l.b16 %v1107
      %v1115 = vpack.c.b16 %v1114, %v1113
      %vm1117 = vcmask 130048
      %v1119 = vsel %vm1117, %v1090, 0
      %v1122 = vsel %vm1117, %v1091, 0
      %v1125 = vsel %vm1117, %v1092, 0
      %v1128 = vsel %vm1117, %v1093, 0
      %v1131 = vsel %vm1117, %v1094, 0
      %v1134 = vsel %vm1117, %v1095, 0
      %v1137 = vsel %vm1117, %v1096, 0
      %v1140 = vsel %vm1117, %v1097, 0
      %v1143 = vsel %vm1117, %v1098, 0
      %v1146 = vsel %vm1117, %v1099, 0
      %v1149 = vsel %vm1117, %v1100, 0
      %v1152 = vsel %vm1117, %v1101, 0
      %v1155 = vsel %vm1117, %v1102, 0
      %v1158 = vsel %vm1117, %v1103, 0
      %v1161 = vsel %vm1117, %v1104, 0
      %v1164 = vsel %vm1117, %v1105, 0
      %1166 = vmatpush.bf16.msra.mxu0 0
      %1167 = vmatpush.bf16.msra.mxu0 0
      %1168 = vmatpush.bf16.msra.mxu0 0
      %1169 = vmatpush.bf16.msra.mxu0 0
      %1170 = vmatpush.bf16.msra.mxu0 0
      %1171 = vmatpush.bf16.msra.mxu0 0
      %1172 = vmatpush.bf16.msra.mxu0 0
      %1173 = vmatpush.bf16.msra.mxu0 %v1115
      %1174 = vmatmul.bf16.gmra.mxu0 %v1119
      %v1175 = vpop.f32.mrf.mxu0
      %v1176 = vadd.f32 %v1109, %v1175
      %v1177 = vpop.f32.mrf.mxu0
      %v1178 = vadd.f32 %v1109, %v1177
      %1179 = vmatmul.bf16.gmra.mxu0 %v1122
      %v1180 = vpop.f32.mrf.mxu0
      %v1181 = vadd.f32 %v1109, %v1180
      %v1182 = vpop.f32.mrf.mxu0
      %v1183 = vadd.f32 %v1109, %v1182
      %1184 = vmatmul.bf16.gmra.mxu0 %v1125
      %v1185 = vpop.f32.mrf.mxu0
      %v1186 = vadd.f32 %v1109, %v1185
      %v1187 = vpop.f32.mrf.mxu0
      %v1188 = vadd.f32 %v1109, %v1187
      %1189 = vmatmul.bf16.gmra.mxu0 %v1128
      %v1190 = vpop.f32.mrf.mxu0
      %v1191 = vadd.f32 %v1109, %v1190
      %v1192 = vpop.f32.mrf.mxu0
      %v1193 = vadd.f32 %v1109, %v1192
      %1194 = vmatmul.bf16.gmra.mxu0 %v1131
      %v1195 = vpop.f32.mrf.mxu0
      %v1196 = vadd.f32 %v1109, %v1195
      %v1197 = vpop.f32.mrf.mxu0
      %v1198 = vadd.f32 %v1109, %v1197
      %1199 = vmatmul.bf16.gmra.mxu0 %v1134
      %v1200 = vpop.f32.mrf.mxu0
      %v1201 = vadd.f32 %v1109, %v1200
      %v1202 = vpop.f32.mrf.mxu0
      %v1203 = vadd.f32 %v1109, %v1202
      %1204 = vmatmul.bf16.gmra.mxu0 %v1137
      %v1205 = vpop.f32.mrf.mxu0
      %v1206 = vadd.f32 %v1109, %v1205
      %v1207 = vpop.f32.mrf.mxu0
      %v1208 = vadd.f32 %v1109, %v1207
      %1209 = vmatmul.bf16.gmra.mxu0 %v1140
      %v1210 = vpop.f32.mrf.mxu0
      %v1211 = vadd.f32 %v1109, %v1210
      %v1212 = vpop.f32.mrf.mxu0
      %v1213 = vadd.f32 %v1109, %v1212
      %1214 = vmatmul.bf16.gmra.mxu0 %v1143
      %v1215 = vpop.f32.mrf.mxu0
      %v1216 = vadd.f32 %v1109, %v1215
      %v1217 = vpop.f32.mrf.mxu0
      %v1218 = vadd.f32 %v1109, %v1217
      %1219 = vmatmul.bf16.gmra.mxu0 %v1146
      %v1220 = vpop.f32.mrf.mxu0
      %v1221 = vadd.f32 %v1109, %v1220
      %v1222 = vpop.f32.mrf.mxu0
      %v1223 = vadd.f32 %v1109, %v1222
      %1224 = vmatmul.bf16.gmra.mxu0 %v1149
      %v1225 = vpop.f32.mrf.mxu0
      %v1226 = vadd.f32 %v1109, %v1225
      %v1227 = vpop.f32.mrf.mxu0
      %v1228 = vadd.f32 %v1109, %v1227
      %1229 = vmatmul.bf16.gmra.mxu0 %v1152
      %v1230 = vpop.f32.mrf.mxu0
      %v1231 = vadd.f32 %v1109, %v1230
      %v1232 = vpop.f32.mrf.mxu0
      %v1233 = vadd.f32 %v1109, %v1232
      %1234 = vmatmul.bf16.gmra.mxu0 %v1155
      %v1235 = vpop.f32.mrf.mxu0
      %v1236 = vadd.f32 %v1109, %v1235
      %v1237 = vpop.f32.mrf.mxu0
      %v1238 = vadd.f32 %v1109, %v1237
      %1239 = vmatmul.bf16.gmra.mxu0 %v1158
      %v1240 = vpop.f32.mrf.mxu0
      %v1241 = vadd.f32 %v1109, %v1240
      %v1242 = vpop.f32.mrf.mxu0
      %v1243 = vadd.f32 %v1109, %v1242
      %1244 = vmatmul.bf16.gmra.mxu0 %v1161
      %v1245 = vpop.f32.mrf.mxu0
      %v1246 = vadd.f32 %v1109, %v1245
      %v1247 = vpop.f32.mrf.mxu0
      %v1248 = vadd.f32 %v1109, %v1247
      %1249 = vmatmul.bf16.gmra.mxu0 %v1164
      %v1250 = vpop.f32.mrf.mxu0
      %v1251 = vadd.f32 %v1109, %v1250
      %v1252 = vpop.f32.mrf.mxu0
      %v1253 = vadd.f32 %v1109, %v1252
      %1254 = vdwg.mxu0
      %v1255 = vmax.f32 %v1176, 0.0
      %v1256 = vmax.f32 %v1178, 0.0
      %v1257 = vmax.f32 %v1181, 0.0
      %v1258 = vmax.f32 %v1183, 0.0
      %v1259 = vmax.f32 %v1186, 0.0
      %v1260 = vmax.f32 %v1188, 0.0
      %v1261 = vmax.f32 %v1191, 0.0
      %v1262 = vmax.f32 %v1193, 0.0
      %v1263 = vmax.f32 %v1196, 0.0
      %v1264 = vmax.f32 %v1198, 0.0
      %v1265 = vmax.f32 %v1201, 0.0
      %v1266 = vmax.f32 %v1203, 0.0
      %v1267 = vmax.f32 %v1206, 0.0
      %v1268 = vmax.f32 %v1208, 0.0
      %v1269 = vmax.f32 %v1211, 0.0
      %v1270 = vmax.f32 %v1213, 0.0
      %v1271 = vmax.f32 %v1216, 0.0
      %v1272 = vmax.f32 %v1218, 0.0
      %v1273 = vmax.f32 %v1221, 0.0
      %v1274 = vmax.f32 %v1223, 0.0
      %v1275 = vmax.f32 %v1226, 0.0
      %v1276 = vmax.f32 %v1228, 0.0
      %v1277 = vmax.f32 %v1231, 0.0
      %v1278 = vmax.f32 %v1233, 0.0
      %v1279 = vmax.f32 %v1236, 0.0
      %v1280 = vmax.f32 %v1238, 0.0
      %v1281 = vmax.f32 %v1241, 0.0
      %v1282 = vmax.f32 %v1243, 0.0
      %v1283 = vmax.f32 %v1246, 0.0
      %v1284 = vmax.f32 %v1248, 0.0
      %v1285 = vmax.f32 %v1251, 0.0
      %v1286 = vmax.f32 %v1253, 0.0
      %v1287 = vpack.c.bf16 %v1256, %v1255
      %v1288 = vpack.c.bf16 %v1258, %v1257
      %v1289 = vpack.c.bf16 %v1260, %v1259
      %v1290 = vpack.c.bf16 %v1262, %v1261
      %v1291 = vpack.c.bf16 %v1264, %v1263
      %v1292 = vpack.c.bf16 %v1266, %v1265
      %v1293 = vpack.c.bf16 %v1268, %v1267
      %v1294 = vpack.c.bf16 %v1270, %v1269
      %v1295 = vpack.c.bf16 %v1272, %v1271
      %v1296 = vpack.c.bf16 %v1274, %v1273
      %v1297 = vpack.c.bf16 %v1276, %v1275
      %v1298 = vpack.c.bf16 %v1278, %v1277
      %v1299 = vpack.c.bf16 %v1280, %v1279
      %v1300 = vpack.c.bf16 %v1282, %v1281
      %v1301 = vpack.c.bf16 %v1284, %v1283
      %v1302 = vpack.c.bf16 %v1286, %v1285
      %v1303 = vld [vmem:[%s5] sm:$0xf]
      %v1304 = vld [vmem:[%s5 + $0x4] sm:$0xf]
      %v1305 = vld [vmem:[%s5 + $0x8] sm:$0xf]
      %v1306 = vld [vmem:[%s5 + $0xc] sm:$0xf]
      %v1307 = vld [vmem:[%s5 + $0x10] sm:$0xf]
      %v1308 = vld [vmem:[%s5 + $0x14] sm:$0xf]
      %v1309 = vld [vmem:[%s5 + $0x18] sm:$0xf]
      %v1310 = vld [vmem:[%s5 + $0x1c] sm:$0xf]
      %v1311 = vld [vmem:[%s5 + $0x20] sm:$0xf]
      %v1312 = vld [vmem:[%s5 + $0x24] sm:$0xf]
      %v1313 = vld [vmem:[%s5 + $0x28] sm:$0xf]
      %v1314 = vld [vmem:[%s5 + $0x2c] sm:$0xf]
      %v1315 = vld [vmem:[%s5 + $0x30] sm:$0xf]
      %v1316 = vld [vmem:[%s5 + $0x34] sm:$0xf]
      %v1317 = vld [vmem:[%s5 + $0x38] sm:$0xf]
      %v1318 = vld [vmem:[%s5 + $0x3c] sm:$0xf]
      %v1320 = vperm.slane %v349, 0
      %v1338 = vunpack.c.l.b16 %v1303
      %v1339 = vunpack.c.l.b16 %v1304
      %v1340 = vunpack.c.l.b16 %v1305
      %v1341 = vunpack.c.l.b16 %v1306
      %v1342 = vunpack.c.l.b16 %v1307
      %v1343 = vunpack.c.l.b16 %v1308
      %v1344 = vunpack.c.l.b16 %v1309
      %v1345 = vunpack.c.l.b16 %v1310
      %v1346 = vunpack.c.l.b16 %v1311
      %v1347 = vunpack.c.l.b16 %v1312
      %v1348 = vunpack.c.l.b16 %v1313
      %v1349 = vunpack.c.l.b16 %v1314
      %v1350 = vunpack.c.l.b16 %v1315
      %v1351 = vunpack.c.l.b16 %v1316
      %v1352 = vunpack.c.l.b16 %v1317
      %v1353 = vunpack.c.l.b16 %v1318
      %v1354 = vpack.c.b16 %v1339, %v1338
      %v1355 = vpack.c.b16 %v1341, %v1340
      %v1356 = vpack.c.b16 %v1343, %v1342
      %v1357 = vpack.c.b16 %v1345, %v1344
      %v1358 = vpack.c.b16 %v1347, %v1346
      %v1359 = vpack.c.b16 %v1349, %v1348
      %v1360 = vpack.c.b16 %v1351, %v1350
      %v1361 = vpack.c.b16 %v1353, %v1352
      %1370 = vmatpush.bf16.msra.mxu0 %v1361
      %1371 = vmatpush.bf16.msra.mxu0 %v1360
      %1372 = vmatpush.bf16.msra.mxu0 %v1359
      %1373 = vmatpush.bf16.msra.mxu0 %v1358
      %1374 = vmatpush.bf16.msra.mxu0 %v1357
      %1375 = vmatpush.bf16.msra.mxu0 %v1356
      %1376 = vmatpush.bf16.msra.mxu0 %v1355
      %1377 = vmatpush.bf16.msra.mxu0 %v1354
      %1378 = vmatmul.bf16.gmra.mxu0 %v1287
      %v1379 = vpop.f32.mrf.mxu0
      %v1380 = vadd.f32 %v1320, %v1379
      %v1381 = vpop.f32.mrf.mxu0
      %v1382 = vadd.f32 %v1320, %v1381
      %1383 = vmatmul.bf16.gmra.mxu0 %v1288
      %v1384 = vpop.f32.mrf.mxu0
      %v1385 = vadd.f32 %v1320, %v1384
      %v1386 = vpop.f32.mrf.mxu0
      %v1387 = vadd.f32 %v1320, %v1386
      %1388 = vmatmul.bf16.gmra.mxu0 %v1289
      %v1389 = vpop.f32.mrf.mxu0
      %v1390 = vadd.f32 %v1320, %v1389
      %v1391 = vpop.f32.mrf.mxu0
      %v1392 = vadd.f32 %v1320, %v1391
      %1393 = vmatmul.bf16.gmra.mxu0 %v1290
      %v1394 = vpop.f32.mrf.mxu0
      %v1395 = vadd.f32 %v1320, %v1394
      %v1396 = vpop.f32.mrf.mxu0
      %v1397 = vadd.f32 %v1320, %v1396
      %1398 = vmatmul.bf16.gmra.mxu0 %v1291
      %v1399 = vpop.f32.mrf.mxu0
      %v1400 = vadd.f32 %v1320, %v1399
      %v1401 = vpop.f32.mrf.mxu0
      %v1402 = vadd.f32 %v1320, %v1401
      %1403 = vmatmul.bf16.gmra.mxu0 %v1292
      %v1404 = vpop.f32.mrf.mxu0
      %v1405 = vadd.f32 %v1320, %v1404
      %v1406 = vpop.f32.mrf.mxu0
      %v1407 = vadd.f32 %v1320, %v1406
      %1408 = vmatmul.bf16.gmra.mxu0 %v1293
      %v1409 = vpop.f32.mrf.mxu0
      %v1410 = vadd.f32 %v1320, %v1409
      %v1411 = vpop.f32.mrf.mxu0
      %v1412 = vadd.f32 %v1320, %v1411
      %1413 = vmatmul.bf16.gmra.mxu0 %v1294
      %v1414 = vpop.f32.mrf.mxu0
      %v1415 = vadd.f32 %v1320, %v1414
      %v1416 = vpop.f32.mrf.mxu0
      %v1417 = vadd.f32 %v1320, %v1416
      %1418 = vmatmul.bf16.gmra.mxu0 %v1295
      %v1419 = vpop.f32.mrf.mxu0
      %v1420 = vadd.f32 %v1320, %v1419
      %v1421 = vpop.f32.mrf.mxu0
      %v1422 = vadd.f32 %v1320, %v1421
      %1423 = vmatmul.bf16.gmra.mxu0 %v1296
      %v1424 = vpop.f32.mrf.mxu0
      %v1425 = vadd.f32 %v1320, %v1424
      %v1426 = vpop.f32.mrf.mxu0
      %v1427 = vadd.f32 %v1320, %v1426
      %1428 = vmatmul.bf16.gmra.mxu0 %v1297
      %v1429 = vpop.f32.mrf.mxu0
      %v1430 = vadd.f32 %v1320, %v1429
      %v1431 = vpop.f32.mrf.mxu0
      %v1432 = vadd.f32 %v1320, %v1431
      %1433 = vmatmul.bf16.gmra.mxu0 %v1298
      %v1434 = vpop.f32.mrf.mxu0
      %v1435 = vadd.f32 %v1320, %v1434
      %v1436 = vpop.f32.mrf.mxu0
      %v1437 = vadd.f32 %v1320, %v1436
      %1438 = vmatmul.bf16.gmra.mxu0 %v1299
      %v1439 = vpop.f32.mrf.mxu0
      %v1440 = vadd.f32 %v1320, %v1439
      %v1441 = vpop.f32.mrf.mxu0
      %v1442 = vadd.f32 %v1320, %v1441
      %1443 = vmatmul.bf16.gmra.mxu0 %v1300
      %v1444 = vpop.f32.mrf.mxu0
      %v1445 = vadd.f32 %v1320, %v1444
      %v1446 = vpop.f32.mrf.mxu0
      %v1447 = vadd.f32 %v1320, %v1446
      %1448 = vmatmul.bf16.gmra.mxu0 %v1301
      %v1449 = vpop.f32.mrf.mxu0
      %v1450 = vadd.f32 %v1320, %v1449
      %v1451 = vpop.f32.mrf.mxu0
      %v1452 = vadd.f32 %v1320, %v1451
      %1453 = vmatmul.bf16.gmra.mxu0 %v1302
      %v1454 = vpop.f32.mrf.mxu0
      %v1455 = vadd.f32 %v1320, %v1454
      %v1456 = vpop.f32.mrf.mxu0
      %v1457 = vadd.f32 %v1320, %v1456
      %1458 = vdwg.mxu0
      %1459 = vst [vmem:[%s337] sm:$0xff] 0.0
      %1460 = vst [vmem:[%s337 + $0x8] sm:$0xff] 0.0
      %1461 = vst [vmem:[%s337 + $0x10] sm:$0xff] 0.0
      %1462 = vst [vmem:[%s337 + $0x18] sm:$0xff] 0.0
      %1463 = vst [vmem:[%s337 + $0x20] sm:$0xff] 0.0
      %1464 = vst [vmem:[%s337 + $0x28] sm:$0xff] 0.0
      %1465 = vst [vmem:[%s337 + $0x30] sm:$0xff] 0.0
      %1466 = vst [vmem:[%s337 + $0x38] sm:$0xff] 0.0
      %1467 = vst [vmem:[%s337 + $0x40] sm:$0xff] 0.0
      %1468 = vst [vmem:[%s337 + $0x48] sm:$0xff] 0.0
      %1469 = vst [vmem:[%s337 + $0x50] sm:$0xff] 0.0
      %1470 = vst [vmem:[%s337 + $0x58] sm:$0xff] 0.0
      %1471 = vst [vmem:[%s337 + $0x60] sm:$0xff] 0.0
      %1472 = vst [vmem:[%s337 + $0x68] sm:$0xff] 0.0
      %1473 = vst [vmem:[%s337 + $0x70] sm:$0xff] 0.0
      %1474 = vst [vmem:[%s337 + $0x78] sm:$0xff] 0.0
      %1475 = vst [vmem:[%s337 + $0x80] sm:$0xff] 0.0
      %1476 = vst [vmem:[%s337 + $0x88] sm:$0xff] 0.0
      %1477 = vst [vmem:[%s337 + $0x90] sm:$0xff] 0.0
      %1478 = vst [vmem:[%s337 + $0x98] sm:$0xff] 0.0
      %1479 = vst [vmem:[%s337 + $0xa0] sm:$0xff] 0.0
      %1480 = vst [vmem:[%s337 + $0xa8] sm:$0xff] 0.0
      %1481 = vst [vmem:[%s337 + $0xb0] sm:$0xff] 0.0
      %1482 = vst [vmem:[%s337 + $0xb8] sm:$0xff] 0.0
      %1483 = vst [vmem:[%s337 + $0xc0] sm:$0xff] 0.0
      %1484 = vst [vmem:[%s337 + $0xc8] sm:$0xff] 0.0
      %1485 = vst [vmem:[%s337 + $0xd0] sm:$0xff] 0.0
      %1486 = vst [vmem:[%s337 + $0xd8] sm:$0xff] 0.0
      %1487 = vst [vmem:[%s337 + $0xe0] sm:$0xff] 0.0
      %1488 = vst [vmem:[%s337 + $0xe8] sm:$0xff] 0.0
      %1489 = vst [vmem:[%s337 + $0xf0] sm:$0xff] 0.0
      %1490 = vst [vmem:[%s337 + $0xf8] sm:$0xff] 0.0
      %1491 = vst.msk [vmem:[%s337] sm:$0xff] %vm1117, %v730
      %1492 = vst.msk [vmem:[%s337 + $0x8] sm:$0xff] %vm1117, %v732
      %1493 = vst.msk [vmem:[%s337 + $0x10] sm:$0xff] %vm1117, %v735
      %1494 = vst.msk [vmem:[%s337 + $0x18] sm:$0xff] %vm1117, %v737
      %1495 = vst.msk [vmem:[%s337 + $0x20] sm:$0xff] %vm1117, %v740
      %1496 = vst.msk [vmem:[%s337 + $0x28] sm:$0xff] %vm1117, %v742
      %1497 = vst.msk [vmem:[%s337 + $0x30] sm:$0xff] %vm1117, %v745
      %1498 = vst.msk [vmem:[%s337 + $0x38] sm:$0xff] %vm1117, %v747
      %1499 = vst.msk [vmem:[%s337 + $0x40] sm:$0xff] %vm1117, %v750
      %1500 = vst.msk [vmem:[%s337 + $0x48] sm:$0xff] %vm1117, %v752
      %1501 = vst.msk [vmem:[%s337 + $0x50] sm:$0xff] %vm1117, %v755
      %1502 = vst.msk [vmem:[%s337 + $0x58] sm:$0xff] %vm1117, %v757
      %1503 = vst.msk [vmem:[%s337 + $0x60] sm:$0xff] %vm1117, %v760
      %1504 = vst.msk [vmem:[%s337 + $0x68] sm:$0xff] %vm1117, %v762
      %1505 = vst.msk [vmem:[%s337 + $0x70] sm:$0xff] %vm1117, %v765
      %1506 = vst.msk [vmem:[%s337 + $0x78] sm:$0xff] %vm1117, %v767
      %1507 = vst.msk [vmem:[%s337 + $0x80] sm:$0xff] %vm1117, %v770
      %1508 = vst.msk [vmem:[%s337 + $0x88] sm:$0xff] %vm1117, %v772
      %1509 = vst.msk [vmem:[%s337 + $0x90] sm:$0xff] %vm1117, %v775
      %1510 = vst.msk [vmem:[%s337 + $0x98] sm:$0xff] %vm1117, %v777
      %1511 = vst.msk [vmem:[%s337 + $0xa0] sm:$0xff] %vm1117, %v780
      %1512 = vst.msk [vmem:[%s337 + $0xa8] sm:$0xff] %vm1117, %v782
      %1513 = vst.msk [vmem:[%s337 + $0xb0] sm:$0xff] %vm1117, %v785
      %1514 = vst.msk [vmem:[%s337 + $0xb8] sm:$0xff] %vm1117, %v787
      %1515 = vst.msk [vmem:[%s337 + $0xc0] sm:$0xff] %vm1117, %v790
      %1516 = vst.msk [vmem:[%s337 + $0xc8] sm:$0xff] %vm1117, %v792
      %1517 = vst.msk [vmem:[%s337 + $0xd0] sm:$0xff] %vm1117, %v795
      %1518 = vst.msk [vmem:[%s337 + $0xd8] sm:$0xff] %vm1117, %v797
      %1519 = vst.msk [vmem:[%s337 + $0xe0] sm:$0xff] %vm1117, %v800
      %1520 = vst.msk [vmem:[%s337 + $0xe8] sm:$0xff] %vm1117, %v802
      %1521 = vst.msk [vmem:[%s337 + $0xf0] sm:$0xff] %vm1117, %v805
      %1522 = vst.msk [vmem:[%s337 + $0xf8] sm:$0xff] %vm1117, %v807
      %1555 = vrot.lane.b32.xlu0 %v819, 16
      %v1556 = vpop.permute.xlu0 %1555
      %1557 = vrot.lane.b32.xlu0 %v821, 16
      %v1558 = vpop.permute.xlu0 %1557
      %1559 = vrot.lane.b32.xlu0 %v824, 16
      %v1560 = vpop.permute.xlu0 %1559
      %1561 = vrot.lane.b32.xlu0 %v826, 16
      %v1562 = vpop.permute.xlu0 %1561
      %1563 = vrot.lane.b32.xlu0 %v829, 16
      %v1564 = vpop.permute.xlu0 %1563
      %1565 = vrot.lane.b32.xlu0 %v831, 16
      %v1566 = vpop.permute.xlu0 %1565
      %1567 = vrot.lane.b32.xlu0 %v834, 16
      %v1568 = vpop.permute.xlu0 %1567
      %1569 = vrot.lane.b32.xlu0 %v836, 16
      %v1570 = vpop.permute.xlu0 %1569
      %1571 = vrot.lane.b32.xlu0 %v839, 16
      %v1572 = vpop.permute.xlu0 %1571
      %1573 = vrot.lane.b32.xlu0 %v841, 16
      %v1574 = vpop.permute.xlu0 %1573
      %1575 = vrot.lane.b32.xlu0 %v844, 16
      %v1576 = vpop.permute.xlu0 %1575
      %1577 = vrot.lane.b32.xlu0 %v846, 16
      %v1578 = vpop.permute.xlu0 %1577
      %1579 = vrot.lane.b32.xlu0 %v849, 16
      %v1580 = vpop.permute.xlu0 %1579
      %1581 = vrot.lane.b32.xlu0 %v851, 16
      %v1582 = vpop.permute.xlu0 %1581
      %1583 = vrot.lane.b32.xlu0 %v854, 16
      %v1584 = vpop.permute.xlu0 %1583
      %1585 = vrot.lane.b32.xlu0 %v856, 16
      %v1586 = vpop.permute.xlu0 %1585
      %1587 = vrot.lane.b32.xlu0 %v859, 16
      %v1588 = vpop.permute.xlu0 %1587
      %1589 = vrot.lane.b32.xlu0 %v861, 16
      %v1590 = vpop.permute.xlu0 %1589
      %1591 = vrot.lane.b32.xlu0 %v864, 16
      %v1592 = vpop.permute.xlu0 %1591
      %1593 = vrot.lane.b32.xlu0 %v866, 16
      %v1594 = vpop.permute.xlu0 %1593
      %1595 = vrot.lane.b32.xlu0 %v869, 16
      %v1596 = vpop.permute.xlu0 %1595
      %1597 = vrot.lane.b32.xlu0 %v871, 16
      %v1598 = vpop.permute.xlu0 %1597
      %1599 = vrot.lane.b32.xlu0 %v874, 16
      %v1600 = vpop.permute.xlu0 %1599
      %1601 = vrot.lane.b32.xlu0 %v876, 16
      %v1602 = vpop.permute.xlu0 %1601
      %1603 = vrot.lane.b32.xlu0 %v879, 16
      %v1604 = vpop.permute.xlu0 %1603
      %1605 = vrot.lane.b32.xlu0 %v881, 16
      %v1606 = vpop.permute.xlu0 %1605
      %1607 = vrot.lane.b32.xlu0 %v884, 16
      %v1608 = vpop.permute.xlu0 %1607
      %1609 = vrot.lane.b32.xlu0 %v886, 16
      %v1610 = vpop.permute.xlu0 %1609
      %1611 = vrot.lane.b32.xlu0 %v889, 16
      %v1612 = vpop.permute.xlu0 %1611
      %1613 = vrot.lane.b32.xlu0 %v891, 16
      %v1614 = vpop.permute.xlu0 %1613
      %1615 = vrot.lane.b32.xlu0 %v894, 16
      %v1616 = vpop.permute.xlu0 %1615
      %1617 = vrot.lane.b32.xlu0 %v896, 16
      %v1618 = vpop.permute.xlu0 %1617
      %vm1651 = vcmask 261248
      %1652 = vst.msk [vmem:[%s337] sm:$0xff] %vm1651, %v1556
      %1653 = vst.msk [vmem:[%s337 + $0x8] sm:$0xff] %vm1651, %v1558
      %1654 = vst.msk [vmem:[%s337 + $0x10] sm:$0xff] %vm1651, %v1560
      %1655 = vst.msk [vmem:[%s337 + $0x18] sm:$0xff] %vm1651, %v1562
      %1656 = vst.msk [vmem:[%s337 + $0x20] sm:$0xff] %vm1651, %v1564
      %1657 = vst.msk [vmem:[%s337 + $0x28] sm:$0xff] %vm1651, %v1566
      %1658 = vst.msk [vmem:[%s337 + $0x30] sm:$0xff] %vm1651, %v1568
      %1659 = vst.msk [vmem:[%s337 + $0x38] sm:$0xff] %vm1651, %v1570
      %1660 = vst.msk [vmem:[%s337 + $0x40] sm:$0xff] %vm1651, %v1572
      %1661 = vst.msk [vmem:[%s337 + $0x48] sm:$0xff] %vm1651, %v1574
      %1662 = vst.msk [vmem:[%s337 + $0x50] sm:$0xff] %vm1651, %v1576
      %1663 = vst.msk [vmem:[%s337 + $0x58] sm:$0xff] %vm1651, %v1578
      %1664 = vst.msk [vmem:[%s337 + $0x60] sm:$0xff] %vm1651, %v1580
      %1665 = vst.msk [vmem:[%s337 + $0x68] sm:$0xff] %vm1651, %v1582
      %1666 = vst.msk [vmem:[%s337 + $0x70] sm:$0xff] %vm1651, %v1584
      %1667 = vst.msk [vmem:[%s337 + $0x78] sm:$0xff] %vm1651, %v1586
      %1668 = vst.msk [vmem:[%s337 + $0x80] sm:$0xff] %vm1651, %v1588
      %1669 = vst.msk [vmem:[%s337 + $0x88] sm:$0xff] %vm1651, %v1590
      %1670 = vst.msk [vmem:[%s337 + $0x90] sm:$0xff] %vm1651, %v1592
      %1671 = vst.msk [vmem:[%s337 + $0x98] sm:$0xff] %vm1651, %v1594
      %1672 = vst.msk [vmem:[%s337 + $0xa0] sm:$0xff] %vm1651, %v1596
      %1673 = vst.msk [vmem:[%s337 + $0xa8] sm:$0xff] %vm1651, %v1598
      %1674 = vst.msk [vmem:[%s337 + $0xb0] sm:$0xff] %vm1651, %v1600
      %1675 = vst.msk [vmem:[%s337 + $0xb8] sm:$0xff] %vm1651, %v1602
      %1676 = vst.msk [vmem:[%s337 + $0xc0] sm:$0xff] %vm1651, %v1604
      %1677 = vst.msk [vmem:[%s337 + $0xc8] sm:$0xff] %vm1651, %v1606
      %1678 = vst.msk [vmem:[%s337 + $0xd0] sm:$0xff] %vm1651, %v1608
      %1679 = vst.msk [vmem:[%s337 + $0xd8] sm:$0xff] %vm1651, %v1610
      %1680 = vst.msk [vmem:[%s337 + $0xe0] sm:$0xff] %vm1651, %v1612
      %1681 = vst.msk [vmem:[%s337 + $0xe8] sm:$0xff] %vm1651, %v1614
      %1682 = vst.msk [vmem:[%s337 + $0xf0] sm:$0xff] %vm1651, %v1616
      %1683 = vst.msk [vmem:[%s337 + $0xf8] sm:$0xff] %vm1651, %v1618
      %1716 = vrot.lane.b32.xlu0 %v1058, 32
      %v1717 = vpop.permute.xlu0 %1716
      %1718 = vrot.lane.b32.xlu0 %v1059, 32
      %v1719 = vpop.permute.xlu0 %1718
      %1720 = vrot.lane.b32.xlu0 %v1060, 32
      %v1721 = vpop.permute.xlu0 %1720
      %1722 = vrot.lane.b32.xlu0 %v1061, 32
      %v1723 = vpop.permute.xlu0 %1722
      %1724 = vrot.lane.b32.xlu0 %v1062, 32
      %v1725 = vpop.permute.xlu0 %1724
      %1726 = vrot.lane.b32.xlu0 %v1063, 32
      %v1727 = vpop.permute.xlu0 %1726
      %1728 = vrot.lane.b32.xlu0 %v1064, 32
      %v1729 = vpop.permute.xlu0 %1728
      %1730 = vrot.lane.b32.xlu0 %v1065, 32
      %v1731 = vpop.permute.xlu0 %1730
      %1732 = vrot.lane.b32.xlu0 %v1066, 32
      %v1733 = vpop.permute.xlu0 %1732
      %1734 = vrot.lane.b32.xlu0 %v1067, 32
      %v1735 = vpop.permute.xlu0 %1734
      %1736 = vrot.lane.b32.xlu0 %v1068, 32
      %v1737 = vpop.permute.xlu0 %1736
      %1738 = vrot.lane.b32.xlu0 %v1069, 32
      %v1739 = vpop.permute.xlu0 %1738
      %1740 = vrot.lane.b32.xlu0 %v1070, 32
      %v1741 = vpop.permute.xlu0 %1740
      %1742 = vrot.lane.b32.xlu0 %v1071, 32
      %v1743 = vpop.permute.xlu0 %1742
      %1744 = vrot.lane.b32.xlu0 %v1072, 32
      %v1745 = vpop.permute.xlu0 %1744
      %1746 = vrot.lane.b32.xlu0 %v1073, 32
      %v1747 = vpop.permute.xlu0 %1746
      %1748 = vrot.lane.b32.xlu0 %v1074, 32
      %v1749 = vpop.permute.xlu0 %1748
      %1750 = vrot.lane.b32.xlu0 %v1075, 32
      %v1751 = vpop.permute.xlu0 %1750
      %1752 = vrot.lane.b32.xlu0 %v1076, 32
      %v1753 = vpop.permute.xlu0 %1752
      %1754 = vrot.lane.b32.xlu0 %v1077, 32
      %v1755 = vpop.permute.xlu0 %1754
      %1756 = vrot.lane.b32.xlu0 %v1078, 32
      %v1757 = vpop.permute.xlu0 %1756
      %1758 = vrot.lane.b32.xlu0 %v1079, 32
      %v1759 = vpop.permute.xlu0 %1758
      %1760 = vrot.lane.b32.xlu0 %v1080, 32
      %v1761 = vpop.permute.xlu0 %1760
      %1762 = vrot.lane.b32.xlu0 %v1081, 32
      %v1763 = vpop.permute.xlu0 %1762
      %1764 = vrot.lane.b32.xlu0 %v1082, 32
      %v1765 = vpop.permute.xlu0 %1764
      %1766 = vrot.lane.b32.xlu0 %v1083, 32
      %v1767 = vpop.permute.xlu0 %1766
      %1768 = vrot.lane.b32.xlu0 %v1084, 32
      %v1769 = vpop.permute.xlu0 %1768
      %1770 = vrot.lane.b32.xlu0 %v1085, 32
      %v1771 = vpop.permute.xlu0 %1770
      %1772 = vrot.lane.b32.xlu0 %v1086, 32
      %v1773 = vpop.permute.xlu0 %1772
      %1774 = vrot.lane.b32.xlu0 %v1087, 32
      %v1775 = vpop.permute.xlu0 %1774
      %1776 = vrot.lane.b32.xlu0 %v1088, 32
      %v1777 = vpop.permute.xlu0 %1776
      %1778 = vrot.lane.b32.xlu0 %v1089, 32
      %v1779 = vpop.permute.xlu0 %1778
      %vm1812 = vcmask 392448
      %1813 = vst.msk [vmem:[%s337] sm:$0xff] %vm1812, %v1717
      %1814 = vst.msk [vmem:[%s337 + $0x8] sm:$0xff] %vm1812, %v1719
      %1815 = vst.msk [vmem:[%s337 + $0x10] sm:$0xff] %vm1812, %v1721
      %1816 = vst.msk [vmem:[%s337 + $0x18] sm:$0xff] %vm1812, %v1723
      %1817 = vst.msk [vmem:[%s337 + $0x20] sm:$0xff] %vm1812, %v1725
      %1818 = vst.msk [vmem:[%s337 + $0x28] sm:$0xff] %vm1812, %v1727
      %1819 = vst.msk [vmem:[%s337 + $0x30] sm:$0xff] %vm1812, %v1729
      %1820 = vst.msk [vmem:[%s337 + $0x38] sm:$0xff] %vm1812, %v1731
      %1821 = vst.msk [vmem:[%s337 + $0x40] sm:$0xff] %vm1812, %v1733
      %1822 = vst.msk [vmem:[%s337 + $0x48] sm:$0xff] %vm1812, %v1735
      %1823 = vst.msk [vmem:[%s337 + $0x50] sm:$0xff] %vm1812, %v1737
      %1824 = vst.msk [vmem:[%s337 + $0x58] sm:$0xff] %vm1812, %v1739
      %1825 = vst.msk [vmem:[%s337 + $0x60] sm:$0xff] %vm1812, %v1741
      %1826 = vst.msk [vmem:[%s337 + $0x68] sm:$0xff] %vm1812, %v1743
      %1827 = vst.msk [vmem:[%s337 + $0x70] sm:$0xff] %vm1812, %v1745
      %1828 = vst.msk [vmem:[%s337 + $0x78] sm:$0xff] %vm1812, %v1747
      %1829 = vst.msk [vmem:[%s337 + $0x80] sm:$0xff] %vm1812, %v1749
      %1830 = vst.msk [vmem:[%s337 + $0x88] sm:$0xff] %vm1812, %v1751
      %1831 = vst.msk [vmem:[%s337 + $0x90] sm:$0xff] %vm1812, %v1753
      %1832 = vst.msk [vmem:[%s337 + $0x98] sm:$0xff] %vm1812, %v1755
      %1833 = vst.msk [vmem:[%s337 + $0xa0] sm:$0xff] %vm1812, %v1757
      %1834 = vst.msk [vmem:[%s337 + $0xa8] sm:$0xff] %vm1812, %v1759
      %1835 = vst.msk [vmem:[%s337 + $0xb0] sm:$0xff] %vm1812, %v1761
      %1836 = vst.msk [vmem:[%s337 + $0xb8] sm:$0xff] %vm1812, %v1763
      %1837 = vst.msk [vmem:[%s337 + $0xc0] sm:$0xff] %vm1812, %v1765
      %1838 = vst.msk [vmem:[%s337 + $0xc8] sm:$0xff] %vm1812, %v1767
      %1839 = vst.msk [vmem:[%s337 + $0xd0] sm:$0xff] %vm1812, %v1769
      %1840 = vst.msk [vmem:[%s337 + $0xd8] sm:$0xff] %vm1812, %v1771
      %1841 = vst.msk [vmem:[%s337 + $0xe0] sm:$0xff] %vm1812, %v1773
      %1842 = vst.msk [vmem:[%s337 + $0xe8] sm:$0xff] %vm1812, %v1775
      %1843 = vst.msk [vmem:[%s337 + $0xf0] sm:$0xff] %vm1812, %v1777
      %1844 = vst.msk [vmem:[%s337 + $0xf8] sm:$0xff] %vm1812, %v1779
      %v1845 = vxor.u32 %v1380, 2147483648
      %v1846 = vxor.u32 %v1382, 2147483648
      %v1847 = vxor.u32 %v1385, 2147483648
      %v1848 = vxor.u32 %v1387, 2147483648
      %v1849 = vxor.u32 %v1390, 2147483648
      %v1850 = vxor.u32 %v1392, 2147483648
      %v1851 = vxor.u32 %v1395, 2147483648
      %v1852 = vxor.u32 %v1397, 2147483648
      %v1853 = vxor.u32 %v1400, 2147483648
      %v1854 = vxor.u32 %v1402, 2147483648
      %v1855 = vxor.u32 %v1405, 2147483648
      %v1856 = vxor.u32 %v1407, 2147483648
      %v1857 = vxor.u32 %v1410, 2147483648
      %v1858 = vxor.u32 %v1412, 2147483648
      %v1859 = vxor.u32 %v1415, 2147483648
      %v1860 = vxor.u32 %v1417, 2147483648
      %v1861 = vxor.u32 %v1420, 2147483648
      %v1862 = vxor.u32 %v1422, 2147483648
      %v1863 = vxor.u32 %v1425, 2147483648
      %v1864 = vxor.u32 %v1427, 2147483648
      %v1865 = vxor.u32 %v1430, 2147483648
      %v1866 = vxor.u32 %v1432, 2147483648
      %v1867 = vxor.u32 %v1435, 2147483648
      %v1868 = vxor.u32 %v1437, 2147483648
      %v1869 = vxor.u32 %v1440, 2147483648
      %v1870 = vxor.u32 %v1442, 2147483648
      %v1871 = vxor.u32 %v1445, 2147483648
      %v1872 = vxor.u32 %v1447, 2147483648
      %v1873 = vxor.u32 %v1450, 2147483648
      %v1874 = vxor.u32 %v1452, 2147483648
      %v1875 = vxor.u32 %v1455, 2147483648
      %v1876 = vxor.u32 %v1457, 2147483648
      %v1877 = vmul.f32 %v1845, 1.442695
      %v1878 = vpow.pop %v1877
      %v1879 = vmul.f32 %v1846, 1.442695
      %v1880 = vpow.pop %v1879
      %v1881 = vmul.f32 %v1847, 1.442695
      %v1882 = vpow.pop %v1881
      %v1883 = vmul.f32 %v1848, 1.442695
      %v1884 = vpow.pop %v1883
      %v1885 = vmul.f32 %v1849, 1.442695
      %v1886 = vpow.pop %v1885
      %v1887 = vmul.f32 %v1850, 1.442695
      %v1888 = vpow.pop %v1887
      %v1889 = vmul.f32 %v1851, 1.442695
      %v1890 = vpow.pop %v1889
      %v1891 = vmul.f32 %v1852, 1.442695
      %v1892 = vpow.pop %v1891
      %v1893 = vmul.f32 %v1853, 1.442695
      %v1894 = vpow.pop %v1893
      %v1895 = vmul.f32 %v1854, 1.442695
      %v1896 = vpow.pop %v1895
      %v1897 = vmul.f32 %v1855, 1.442695
      %v1898 = vpow.pop %v1897
      %v1899 = vmul.f32 %v1856, 1.442695
      %v1900 = vpow.pop %v1899
      %v1901 = vmul.f32 %v1857, 1.442695
      %v1902 = vpow.pop %v1901
      %v1903 = vmul.f32 %v1858, 1.442695
      %v1904 = vpow.pop %v1903
      %v1905 = vmul.f32 %v1859, 1.442695
      %v1906 = vpow.pop %v1905
      %v1907 = vmul.f32 %v1860, 1.442695
      %v1908 = vpow.pop %v1907
      %v1909 = vmul.f32 %v1861, 1.442695
      %v1910 = vpow.pop %v1909
      %v1911 = vmul.f32 %v1862, 1.442695
      %v1912 = vpow.pop %v1911
      %v1913 = vmul.f32 %v1863, 1.442695
      %v1914 = vpow.pop %v1913
      %v1915 = vmul.f32 %v1864, 1.442695
      %v1916 = vpow.pop %v1915
      %v1917 = vmul.f32 %v1865, 1.442695
      %v1918 = vpow.pop %v1917
      %v1919 = vmul.f32 %v1866, 1.442695
      %v1920 = vpow.pop %v1919
      %v1921 = vmul.f32 %v1867, 1.442695
      %v1922 = vpow.pop %v1921
      %v1923 = vmul.f32 %v1868, 1.442695
      %v1924 = vpow.pop %v1923
      %v1925 = vmul.f32 %v1869, 1.442695
      %v1926 = vpow.pop %v1925
      %v1927 = vmul.f32 %v1870, 1.442695
      %v1928 = vpow.pop %v1927
      %v1929 = vmul.f32 %v1871, 1.442695
      %v1930 = vpow.pop %v1929
      %v1931 = vmul.f32 %v1872, 1.442695
      %v1932 = vpow.pop %v1931
      %v1933 = vmul.f32 %v1873, 1.442695
      %v1934 = vpow.pop %v1933
      %v1935 = vmul.f32 %v1874, 1.442695
      %v1936 = vpow.pop %v1935
      %v1937 = vmul.f32 %v1875, 1.442695
      %v1938 = vpow.pop %v1937
      %v1939 = vmul.f32 %v1876, 1.442695
      %v1940 = vpow.pop %v1939
      %v1941 = vadd.f32 %v1878, 1.0
      %v1942 = vadd.f32 %v1880, 1.0
      %v1943 = vadd.f32 %v1882, 1.0
      %v1944 = vadd.f32 %v1884, 1.0
      %v1945 = vadd.f32 %v1886, 1.0
      %v1946 = vadd.f32 %v1888, 1.0
      %v1947 = vadd.f32 %v1890, 1.0
      %v1948 = vadd.f32 %v1892, 1.0
      %v1949 = vadd.f32 %v1894, 1.0
      %v1950 = vadd.f32 %v1896, 1.0
      %v1951 = vadd.f32 %v1898, 1.0
      %v1952 = vadd.f32 %v1900, 1.0
      %v1953 = vadd.f32 %v1902, 1.0
      %v1954 = vadd.f32 %v1904, 1.0
      %v1955 = vadd.f32 %v1906, 1.0
      %v1956 = vadd.f32 %v1908, 1.0
      %v1957 = vadd.f32 %v1910, 1.0
      %v1958 = vadd.f32 %v1912, 1.0
      %v1959 = vadd.f32 %v1914, 1.0
      %v1960 = vadd.f32 %v1916, 1.0
      %v1961 = vadd.f32 %v1918, 1.0
      %v1962 = vadd.f32 %v1920, 1.0
      %v1963 = vadd.f32 %v1922, 1.0
      %v1964 = vadd.f32 %v1924, 1.0
      %v1965 = vadd.f32 %v1926, 1.0
      %v1966 = vadd.f32 %v1928, 1.0
      %v1967 = vadd.f32 %v1930, 1.0
      %v1968 = vadd.f32 %v1932, 1.0
      %v1969 = vadd.f32 %v1934, 1.0
      %v1970 = vadd.f32 %v1936, 1.0
      %v1971 = vadd.f32 %v1938, 1.0
      %v1972 = vadd.f32 %v1940, 1.0
      %v1973 = vrcp.pop %v1941
      %v1974 = vmul.f32 %v1941, %v1973
      %v1975 = vsub.f32 1.0, %v1974
      %v1976 = vmul.f32 %v1973, %v1975
      %v1977 = vadd.f32 %v1973, %v1976
      %vm1978 = vweird.f32 %v1941
      %vm1979 = vweird.f32 %v1973
      %vm1980 = vmor %vm1978, %vm1979
      %v1981 = vsel %vm1980, %v1973, %v1977
      %v1982 = vand.u32 2147483647, %v1941
      %vm1983 = vcmp.eq.f32.partialorder %v1982, 8.507059e+37
      %v1984 = vand.u32 %v1941, 2147483648
      %v1985 = vor.u32 1.1754944e-38, %v1984
      %v1986 = vsel %vm1983, %v1985, %v1981
      %v1987 = vmul.f32 1.0, %v1986
      %v1988 = vrcp.pop %v1942
      %v1989 = vmul.f32 %v1942, %v1988
      %v1990 = vsub.f32 1.0, %v1989
      %v1991 = vmul.f32 %v1988, %v1990
      %v1992 = vadd.f32 %v1988, %v1991
      %vm1993 = vweird.f32 %v1942
      %vm1994 = vweird.f32 %v1988
      %vm1995 = vmor %vm1993, %vm1994
      %v1996 = vsel %vm1995, %v1988, %v1992
      %v1997 = vand.u32 2147483647, %v1942
      %vm1998 = vcmp.eq.f32.partialorder %v1997, 8.507059e+37
      %v1999 = vand.u32 %v1942, 2147483648
      %v2000 = vor.u32 1.1754944e-38, %v1999
      %v2001 = vsel %vm1998, %v2000, %v1996
      %v2002 = vmul.f32 1.0, %v2001
      %v2003 = vrcp.pop %v1943
      %v2004 = vmul.f32 %v1943, %v2003
      %v2005 = vsub.f32 1.0, %v2004
      %v2006 = vmul.f32 %v2003, %v2005
      %v2007 = vadd.f32 %v2003, %v2006
      %vm2008 = vweird.f32 %v1943
      %vm2009 = vweird.f32 %v2003
      %vm2010 = vmor %vm2008, %vm2009
      %v2011 = vsel %vm2010, %v2003, %v2007
      %v2012 = vand.u32 2147483647, %v1943
      %vm2013 = vcmp.eq.f32.partialorder %v2012, 8.507059e+37
      %v2014 = vand.u32 %v1943, 2147483648
      %v2015 = vor.u32 1.1754944e-38, %v2014
      %v2016 = vsel %vm2013, %v2015, %v2011
      %v2017 = vmul.f32 1.0, %v2016
      %v2018 = vrcp.pop %v1944
      %v2019 = vmul.f32 %v1944, %v2018
      %v2020 = vsub.f32 1.0, %v2019
      %v2021 = vmul.f32 %v2018, %v2020
      %v2022 = vadd.f32 %v2018, %v2021
      %vm2023 = vweird.f32 %v1944
      %vm2024 = vweird.f32 %v2018
      %vm2025 = vmor %vm2023, %vm2024
      %v2026 = vsel %vm2025, %v2018, %v2022
      %v2027 = vand.u32 2147483647, %v1944
      %vm2028 = vcmp.eq.f32.partialorder %v2027, 8.507059e+37
      %v2029 = vand.u32 %v1944, 2147483648
      %v2030 = vor.u32 1.1754944e-38, %v2029
      %v2031 = vsel %vm2028, %v2030, %v2026
      %v2032 = vmul.f32 1.0, %v2031
      %v2033 = vrcp.pop %v1945
      %v2034 = vmul.f32 %v1945, %v2033
      %v2035 = vsub.f32 1.0, %v2034
      %v2036 = vmul.f32 %v2033, %v2035
      %v2037 = vadd.f32 %v2033, %v2036
      %vm2038 = vweird.f32 %v1945
      %vm2039 = vweird.f32 %v2033
      %vm2040 = vmor %vm2038, %vm2039
      %v2041 = vsel %vm2040, %v2033, %v2037
      %v2042 = vand.u32 2147483647, %v1945
      %vm2043 = vcmp.eq.f32.partialorder %v2042, 8.507059e+37
      %v2044 = vand.u32 %v1945, 2147483648
      %v2045 = vor.u32 1.1754944e-38, %v2044
      %v2046 = vsel %vm2043, %v2045, %v2041
      %v2047 = vmul.f32 1.0, %v2046
      %v2048 = vrcp.pop %v1946
      %v2049 = vmul.f32 %v1946, %v2048
      %v2050 = vsub.f32 1.0, %v2049
      %v2051 = vmul.f32 %v2048, %v2050
      %v2052 = vadd.f32 %v2048, %v2051
      %vm2053 = vweird.f32 %v1946
      %vm2054 = vweird.f32 %v2048
      %vm2055 = vmor %vm2053, %vm2054
      %v2056 = vsel %vm2055, %v2048, %v2052
      %v2057 = vand.u32 2147483647, %v1946
      %vm2058 = vcmp.eq.f32.partialorder %v2057, 8.507059e+37
      %v2059 = vand.u32 %v1946, 2147483648
      %v2060 = vor.u32 1.1754944e-38, %v2059
      %v2061 = vsel %vm2058, %v2060, %v2056
      %v2062 = vmul.f32 1.0, %v2061
      %v2063 = vrcp.pop %v1947
      %v2064 = vmul.f32 %v1947, %v2063
      %v2065 = vsub.f32 1.0, %v2064
      %v2066 = vmul.f32 %v2063, %v2065
      %v2067 = vadd.f32 %v2063, %v2066
      %vm2068 = vweird.f32 %v1947
      %vm2069 = vweird.f32 %v2063
      %vm2070 = vmor %vm2068, %vm2069
      %v2071 = vsel %vm2070, %v2063, %v2067
      %v2072 = vand.u32 2147483647, %v1947
      %vm2073 = vcmp.eq.f32.partialorder %v2072, 8.507059e+37
      %v2074 = vand.u32 %v1947, 2147483648
      %v2075 = vor.u32 1.1754944e-38, %v2074
      %v2076 = vsel %vm2073, %v2075, %v2071
      %v2077 = vmul.f32 1.0, %v2076
      %v2078 = vrcp.pop %v1948
      %v2079 = vmul.f32 %v1948, %v2078
      %v2080 = vsub.f32 1.0, %v2079
      %v2081 = vmul.f32 %v2078, %v2080
      %v2082 = vadd.f32 %v2078, %v2081
      %vm2083 = vweird.f32 %v1948
      %vm2084 = vweird.f32 %v2078
      %vm2085 = vmor %vm2083, %vm2084
      %v2086 = vsel %vm2085, %v2078, %v2082
      %v2087 = vand.u32 2147483647, %v1948
      %vm2088 = vcmp.eq.f32.partialorder %v2087, 8.507059e+37
      %v2089 = vand.u32 %v1948, 2147483648
      %v2090 = vor.u32 1.1754944e-38, %v2089
      %v2091 = vsel %vm2088, %v2090, %v2086
      %v2092 = vmul.f32 1.0, %v2091
      %v2093 = vrcp.pop %v1949
      %v2094 = vmul.f32 %v1949, %v2093
      %v2095 = vsub.f32 1.0, %v2094
      %v2096 = vmul.f32 %v2093, %v2095
      %v2097 = vadd.f32 %v2093, %v2096
      %vm2098 = vweird.f32 %v1949
      %vm2099 = vweird.f32 %v2093
      %vm2100 = vmor %vm2098, %vm2099
      %v2101 = vsel %vm2100, %v2093, %v2097
      %v2102 = vand.u32 2147483647, %v1949
      %vm2103 = vcmp.eq.f32.partialorder %v2102, 8.507059e+37
      %v2104 = vand.u32 %v1949, 2147483648
      %v2105 = vor.u32 1.1754944e-38, %v2104
      %v2106 = vsel %vm2103, %v2105, %v2101
      %v2107 = vmul.f32 1.0, %v2106
      %v2108 = vrcp.pop %v1950
      %v2109 = vmul.f32 %v1950, %v2108
      %v2110 = vsub.f32 1.0, %v2109
      %v2111 = vmul.f32 %v2108, %v2110
      %v2112 = vadd.f32 %v2108, %v2111
      %vm2113 = vweird.f32 %v1950
      %vm2114 = vweird.f32 %v2108
      %vm2115 = vmor %vm2113, %vm2114
      %v2116 = vsel %vm2115, %v2108, %v2112
      %v2117 = vand.u32 2147483647, %v1950
      %vm2118 = vcmp.eq.f32.partialorder %v2117, 8.507059e+37
      %v2119 = vand.u32 %v1950, 2147483648
      %v2120 = vor.u32 1.1754944e-38, %v2119
      %v2121 = vsel %vm2118, %v2120, %v2116
      %v2122 = vmul.f32 1.0, %v2121
      %v2123 = vrcp.pop %v1951
      %v2124 = vmul.f32 %v1951, %v2123
      %v2125 = vsub.f32 1.0, %v2124
      %v2126 = vmul.f32 %v2123, %v2125
      %v2127 = vadd.f32 %v2123, %v2126
      %vm2128 = vweird.f32 %v1951
      %vm2129 = vweird.f32 %v2123
      %vm2130 = vmor %vm2128, %vm2129
      %v2131 = vsel %vm2130, %v2123, %v2127
      %v2132 = vand.u32 2147483647, %v1951
      %vm2133 = vcmp.eq.f32.partialorder %v2132, 8.507059e+37
      %v2134 = vand.u32 %v1951, 2147483648
      %v2135 = vor.u32 1.1754944e-38, %v2134
      %v2136 = vsel %vm2133, %v2135, %v2131
      %v2137 = vmul.f32 1.0, %v2136
      %v2138 = vrcp.pop %v1952
      %v2139 = vmul.f32 %v1952, %v2138
      %v2140 = vsub.f32 1.0, %v2139
      %v2141 = vmul.f32 %v2138, %v2140
      %v2142 = vadd.f32 %v2138, %v2141
      %vm2143 = vweird.f32 %v1952
      %vm2144 = vweird.f32 %v2138
      %vm2145 = vmor %vm2143, %vm2144
      %v2146 = vsel %vm2145, %v2138, %v2142
      %v2147 = vand.u32 2147483647, %v1952
      %vm2148 = vcmp.eq.f32.partialorder %v2147, 8.507059e+37
      %v2149 = vand.u32 %v1952, 2147483648
      %v2150 = vor.u32 1.1754944e-38, %v2149
      %v2151 = vsel %vm2148, %v2150, %v2146
      %v2152 = vmul.f32 1.0, %v2151
      %v2153 = vrcp.pop %v1953
      %v2154 = vmul.f32 %v1953, %v2153
      %v2155 = vsub.f32 1.0, %v2154
      %v2156 = vmul.f32 %v2153, %v2155
      %v2157 = vadd.f32 %v2153, %v2156
      %vm2158 = vweird.f32 %v1953
      %vm2159 = vweird.f32 %v2153
      %vm2160 = vmor %vm2158, %vm2159
      %v2161 = vsel %vm2160, %v2153, %v2157
      %v2162 = vand.u32 2147483647, %v1953
      %vm2163 = vcmp.eq.f32.partialorder %v2162, 8.507059e+37
      %v2164 = vand.u32 %v1953, 2147483648
      %v2165 = vor.u32 1.1754944e-38, %v2164
      %v2166 = vsel %vm2163, %v2165, %v2161
      %v2167 = vmul.f32 1.0, %v2166
      %v2168 = vrcp.pop %v1954
      %v2169 = vmul.f32 %v1954, %v2168
      %v2170 = vsub.f32 1.0, %v2169
      %v2171 = vmul.f32 %v2168, %v2170
      %v2172 = vadd.f32 %v2168, %v2171
      %vm2173 = vweird.f32 %v1954
      %vm2174 = vweird.f32 %v2168
      %vm2175 = vmor %vm2173, %vm2174
      %v2176 = vsel %vm2175, %v2168, %v2172
      %v2177 = vand.u32 2147483647, %v1954
      %vm2178 = vcmp.eq.f32.partialorder %v2177, 8.507059e+37
      %v2179 = vand.u32 %v1954, 2147483648
      %v2180 = vor.u32 1.1754944e-38, %v2179
      %v2181 = vsel %vm2178, %v2180, %v2176
      %v2182 = vmul.f32 1.0, %v2181
      %v2183 = vrcp.pop %v1955
      %v2184 = vmul.f32 %v1955, %v2183
      %v2185 = vsub.f32 1.0, %v2184
      %v2186 = vmul.f32 %v2183, %v2185
      %v2187 = vadd.f32 %v2183, %v2186
      %vm2188 = vweird.f32 %v1955
      %vm2189 = vweird.f32 %v2183
      %vm2190 = vmor %vm2188, %vm2189
      %v2191 = vsel %vm2190, %v2183, %v2187
      %v2192 = vand.u32 2147483647, %v1955
      %vm2193 = vcmp.eq.f32.partialorder %v2192, 8.507059e+37
      %v2194 = vand.u32 %v1955, 2147483648
      %v2195 = vor.u32 1.1754944e-38, %v2194
      %v2196 = vsel %vm2193, %v2195, %v2191
      %v2197 = vmul.f32 1.0, %v2196
      %v2198 = vrcp.pop %v1956
      %v2199 = vmul.f32 %v1956, %v2198
      %v2200 = vsub.f32 1.0, %v2199
      %v2201 = vmul.f32 %v2198, %v2200
      %v2202 = vadd.f32 %v2198, %v2201
      %vm2203 = vweird.f32 %v1956
      %vm2204 = vweird.f32 %v2198
      %vm2205 = vmor %vm2203, %vm2204
      %v2206 = vsel %vm2205, %v2198, %v2202
      %v2207 = vand.u32 2147483647, %v1956
      %vm2208 = vcmp.eq.f32.partialorder %v2207, 8.507059e+37
      %v2209 = vand.u32 %v1956, 2147483648
      %v2210 = vor.u32 1.1754944e-38, %v2209
      %v2211 = vsel %vm2208, %v2210, %v2206
      %v2212 = vmul.f32 1.0, %v2211
      %v2213 = vrcp.pop %v1957
      %v2214 = vmul.f32 %v1957, %v2213
      %v2215 = vsub.f32 1.0, %v2214
      %v2216 = vmul.f32 %v2213, %v2215
      %v2217 = vadd.f32 %v2213, %v2216
      %vm2218 = vweird.f32 %v1957
      %vm2219 = vweird.f32 %v2213
      %vm2220 = vmor %vm2218, %vm2219
      %v2221 = vsel %vm2220, %v2213, %v2217
      %v2222 = vand.u32 2147483647, %v1957
      %vm2223 = vcmp.eq.f32.partialorder %v2222, 8.507059e+37
      %v2224 = vand.u32 %v1957, 2147483648
      %v2225 = vor.u32 1.1754944e-38, %v2224
      %v2226 = vsel %vm2223, %v2225, %v2221
      %v2227 = vmul.f32 1.0, %v2226
      %v2228 = vrcp.pop %v1958
      %v2229 = vmul.f32 %v1958, %v2228
      %v2230 = vsub.f32 1.0, %v2229
      %v2231 = vmul.f32 %v2228, %v2230
      %v2232 = vadd.f32 %v2228, %v2231
      %vm2233 = vweird.f32 %v1958
      %vm2234 = vweird.f32 %v2228
      %vm2235 = vmor %vm2233, %vm2234
      %v2236 = vsel %vm2235, %v2228, %v2232
      %v2237 = vand.u32 2147483647, %v1958
      %vm2238 = vcmp.eq.f32.partialorder %v2237, 8.507059e+37
      %v2239 = vand.u32 %v1958, 2147483648
      %v2240 = vor.u32 1.1754944e-38, %v2239
      %v2241 = vsel %vm2238, %v2240, %v2236
      %v2242 = vmul.f32 1.0, %v2241
      %v2243 = vrcp.pop %v1959
      %v2244 = vmul.f32 %v1959, %v2243
      %v2245 = vsub.f32 1.0, %v2244
      %v2246 = vmul.f32 %v2243, %v2245
      %v2247 = vadd.f32 %v2243, %v2246
      %vm2248 = vweird.f32 %v1959
      %vm2249 = vweird.f32 %v2243
      %vm2250 = vmor %vm2248, %vm2249
      %v2251 = vsel %vm2250, %v2243, %v2247
      %v2252 = vand.u32 2147483647, %v1959
      %vm2253 = vcmp.eq.f32.partialorder %v2252, 8.507059e+37
      %v2254 = vand.u32 %v1959, 2147483648
      %v2255 = vor.u32 1.1754944e-38, %v2254
      %v2256 = vsel %vm2253, %v2255, %v2251
      %v2257 = vmul.f32 1.0, %v2256
      %v2258 = vrcp.pop %v1960
      %v2259 = vmul.f32 %v1960, %v2258
      %v2260 = vsub.f32 1.0, %v2259
      %v2261 = vmul.f32 %v2258, %v2260
      %v2262 = vadd.f32 %v2258, %v2261
      %vm2263 = vweird.f32 %v1960
      %vm2264 = vweird.f32 %v2258
      %vm2265 = vmor %vm2263, %vm2264
      %v2266 = vsel %vm2265, %v2258, %v2262
      %v2267 = vand.u32 2147483647, %v1960
      %vm2268 = vcmp.eq.f32.partialorder %v2267, 8.507059e+37
      %v2269 = vand.u32 %v1960, 2147483648
      %v2270 = vor.u32 1.1754944e-38, %v2269
      %v2271 = vsel %vm2268, %v2270, %v2266
      %v2272 = vmul.f32 1.0, %v2271
      %v2273 = vrcp.pop %v1961
      %v2274 = vmul.f32 %v1961, %v2273
      %v2275 = vsub.f32 1.0, %v2274
      %v2276 = vmul.f32 %v2273, %v2275
      %v2277 = vadd.f32 %v2273, %v2276
      %vm2278 = vweird.f32 %v1961
      %vm2279 = vweird.f32 %v2273
      %vm2280 = vmor %vm2278, %vm2279
      %v2281 = vsel %vm2280, %v2273, %v2277
      %v2282 = vand.u32 2147483647, %v1961
      %vm2283 = vcmp.eq.f32.partialorder %v2282, 8.507059e+37
      %v2284 = vand.u32 %v1961, 2147483648
      %v2285 = vor.u32 1.1754944e-38, %v2284
      %v2286 = vsel %vm2283, %v2285, %v2281
      %v2287 = vmul.f32 1.0, %v2286
      %v2288 = vrcp.pop %v1962
      %v2289 = vmul.f32 %v1962, %v2288
      %v2290 = vsub.f32 1.0, %v2289
      %v2291 = vmul.f32 %v2288, %v2290
      %v2292 = vadd.f32 %v2288, %v2291
      %vm2293 = vweird.f32 %v1962
      %vm2294 = vweird.f32 %v2288
      %vm2295 = vmor %vm2293, %vm2294
      %v2296 = vsel %vm2295, %v2288, %v2292
      %v2297 = vand.u32 2147483647, %v1962
      %vm2298 = vcmp.eq.f32.partialorder %v2297, 8.507059e+37
      %v2299 = vand.u32 %v1962, 2147483648
      %v2300 = vor.u32 1.1754944e-38, %v2299
      %v2301 = vsel %vm2298, %v2300, %v2296
      %v2302 = vmul.f32 1.0, %v2301
      %v2303 = vrcp.pop %v1963
      %v2304 = vmul.f32 %v1963, %v2303
      %v2305 = vsub.f32 1.0, %v2304
      %v2306 = vmul.f32 %v2303, %v2305
      %v2307 = vadd.f32 %v2303, %v2306
      %vm2308 = vweird.f32 %v1963
      %vm2309 = vweird.f32 %v2303
      %vm2310 = vmor %vm2308, %vm2309
      %v2311 = vsel %vm2310, %v2303, %v2307
      %v2312 = vand.u32 2147483647, %v1963
      %vm2313 = vcmp.eq.f32.partialorder %v2312, 8.507059e+37
      %v2314 = vand.u32 %v1963, 2147483648
      %v2315 = vor.u32 1.1754944e-38, %v2314
      %v2316 = vsel %vm2313, %v2315, %v2311
      %v2317 = vmul.f32 1.0, %v2316
      %v2318 = vrcp.pop %v1964
      %v2319 = vmul.f32 %v1964, %v2318
      %v2320 = vsub.f32 1.0, %v2319
      %v2321 = vmul.f32 %v2318, %v2320
      %v2322 = vadd.f32 %v2318, %v2321
      %vm2323 = vweird.f32 %v1964
      %vm2324 = vweird.f32 %v2318
      %vm2325 = vmor %vm2323, %vm2324
      %v2326 = vsel %vm2325, %v2318, %v2322
      %v2327 = vand.u32 2147483647, %v1964
      %vm2328 = vcmp.eq.f32.partialorder %v2327, 8.507059e+37
      %v2329 = vand.u32 %v1964, 2147483648
      %v2330 = vor.u32 1.1754944e-38, %v2329
      %v2331 = vsel %vm2328, %v2330, %v2326
      %v2332 = vmul.f32 1.0, %v2331
      %v2333 = vrcp.pop %v1965
      %v2334 = vmul.f32 %v1965, %v2333
      %v2335 = vsub.f32 1.0, %v2334
      %v2336 = vmul.f32 %v2333, %v2335
      %v2337 = vadd.f32 %v2333, %v2336
      %vm2338 = vweird.f32 %v1965
      %vm2339 = vweird.f32 %v2333
      %vm2340 = vmor %vm2338, %vm2339
      %v2341 = vsel %vm2340, %v2333, %v2337
      %v2342 = vand.u32 2147483647, %v1965
      %vm2343 = vcmp.eq.f32.partialorder %v2342, 8.507059e+37
      %v2344 = vand.u32 %v1965, 2147483648
      %v2345 = vor.u32 1.1754944e-38, %v2344
      %v2346 = vsel %vm2343, %v2345, %v2341
      %v2347 = vmul.f32 1.0, %v2346
      %v2348 = vrcp.pop %v1966
      %v2349 = vmul.f32 %v1966, %v2348
      %v2350 = vsub.f32 1.0, %v2349
      %v2351 = vmul.f32 %v2348, %v2350
      %v2352 = vadd.f32 %v2348, %v2351
      %vm2353 = vweird.f32 %v1966
      %vm2354 = vweird.f32 %v2348
      %vm2355 = vmor %vm2353, %vm2354
      %v2356 = vsel %vm2355, %v2348, %v2352
      %v2357 = vand.u32 2147483647, %v1966
      %vm2358 = vcmp.eq.f32.partialorder %v2357, 8.507059e+37
      %v2359 = vand.u32 %v1966, 2147483648
      %v2360 = vor.u32 1.1754944e-38, %v2359
      %v2361 = vsel %vm2358, %v2360, %v2356
      %v2362 = vmul.f32 1.0, %v2361
      %v2363 = vrcp.pop %v1967
      %v2364 = vmul.f32 %v1967, %v2363
      %v2365 = vsub.f32 1.0, %v2364
      %v2366 = vmul.f32 %v2363, %v2365
      %v2367 = vadd.f32 %v2363, %v2366
      %vm2368 = vweird.f32 %v1967
      %vm2369 = vweird.f32 %v2363
      %vm2370 = vmor %vm2368, %vm2369
      %v2371 = vsel %vm2370, %v2363, %v2367
      %v2372 = vand.u32 2147483647, %v1967
      %vm2373 = vcmp.eq.f32.partialorder %v2372, 8.507059e+37
      %v2374 = vand.u32 %v1967, 2147483648
      %v2375 = vor.u32 1.1754944e-38, %v2374
      %v2376 = vsel %vm2373, %v2375, %v2371
      %v2377 = vmul.f32 1.0, %v2376
      %v2378 = vrcp.pop %v1968
      %v2379 = vmul.f32 %v1968, %v2378
      %v2380 = vsub.f32 1.0, %v2379
      %v2381 = vmul.f32 %v2378, %v2380
      %v2382 = vadd.f32 %v2378, %v2381
      %vm2383 = vweird.f32 %v1968
      %vm2384 = vweird.f32 %v2378
      %vm2385 = vmor %vm2383, %vm2384
      %v2386 = vsel %vm2385, %v2378, %v2382
      %v2387 = vand.u32 2147483647, %v1968
      %vm2388 = vcmp.eq.f32.partialorder %v2387, 8.507059e+37
      %v2389 = vand.u32 %v1968, 2147483648
      %v2390 = vor.u32 1.1754944e-38, %v2389
      %v2391 = vsel %vm2388, %v2390, %v2386
      %v2392 = vmul.f32 1.0, %v2391
      %v2393 = vrcp.pop %v1969
      %v2394 = vmul.f32 %v1969, %v2393
      %v2395 = vsub.f32 1.0, %v2394
      %v2396 = vmul.f32 %v2393, %v2395
      %v2397 = vadd.f32 %v2393, %v2396
      %vm2398 = vweird.f32 %v1969
      %vm2399 = vweird.f32 %v2393
      %vm2400 = vmor %vm2398, %vm2399
      %v2401 = vsel %vm2400, %v2393, %v2397
      %v2402 = vand.u32 2147483647, %v1969
      %vm2403 = vcmp.eq.f32.partialorder %v2402, 8.507059e+37
      %v2404 = vand.u32 %v1969, 2147483648
      %v2405 = vor.u32 1.1754944e-38, %v2404
      %v2406 = vsel %vm2403, %v2405, %v2401
      %v2407 = vmul.f32 1.0, %v2406
      %v2408 = vrcp.pop %v1970
      %v2409 = vmul.f32 %v1970, %v2408
      %v2410 = vsub.f32 1.0, %v2409
      %v2411 = vmul.f32 %v2408, %v2410
      %v2412 = vadd.f32 %v2408, %v2411
      %vm2413 = vweird.f32 %v1970
      %vm2414 = vweird.f32 %v2408
      %vm2415 = vmor %vm2413, %vm2414
      %v2416 = vsel %vm2415, %v2408, %v2412
      %v2417 = vand.u32 2147483647, %v1970
      %vm2418 = vcmp.eq.f32.partialorder %v2417, 8.507059e+37
      %v2419 = vand.u32 %v1970, 2147483648
      %v2420 = vor.u32 1.1754944e-38, %v2419
      %v2421 = vsel %vm2418, %v2420, %v2416
      %v2422 = vmul.f32 1.0, %v2421
      %v2423 = vrcp.pop %v1971
      %v2424 = vmul.f32 %v1971, %v2423
      %v2425 = vsub.f32 1.0, %v2424
      %v2426 = vmul.f32 %v2423, %v2425
      %v2427 = vadd.f32 %v2423, %v2426
      %vm2428 = vweird.f32 %v1971
      %vm2429 = vweird.f32 %v2423
      %vm2430 = vmor %vm2428, %vm2429
      %v2431 = vsel %vm2430, %v2423, %v2427
      %v2432 = vand.u32 2147483647, %v1971
      %vm2433 = vcmp.eq.f32.partialorder %v2432, 8.507059e+37
      %v2434 = vand.u32 %v1971, 2147483648
      %v2435 = vor.u32 1.1754944e-38, %v2434
      %v2436 = vsel %vm2433, %v2435, %v2431
      %v2437 = vmul.f32 1.0, %v2436
      %v2438 = vrcp.pop %v1972
      %v2439 = vmul.f32 %v1972, %v2438
      %v2440 = vsub.f32 1.0, %v2439
      %v2441 = vmul.f32 %v2438, %v2440
      %v2442 = vadd.f32 %v2438, %v2441
      %vm2443 = vweird.f32 %v1972
      %vm2444 = vweird.f32 %v2438
      %vm2445 = vmor %vm2443, %vm2444
      %v2446 = vsel %vm2445, %v2438, %v2442
      %v2447 = vand.u32 2147483647, %v1972
      %vm2448 = vcmp.eq.f32.partialorder %v2447, 8.507059e+37
      %v2449 = vand.u32 %v1972, 2147483648
      %v2450 = vor.u32 1.1754944e-38, %v2449
      %v2451 = vsel %vm2448, %v2450, %v2446
      %v2452 = vmul.f32 1.0, %v2451
      %v2453 = vpack.c.bf16 %v1987, %v1987
      %v2454 = vpack.c.bf16 %v2002, %v2002
      %v2455 = vpack.c.bf16 %v2017, %v2017
      %v2456 = vpack.c.bf16 %v2032, %v2032
      %v2457 = vpack.c.bf16 %v2047, %v2047
      %v2458 = vpack.c.bf16 %v2062, %v2062
      %v2459 = vpack.c.bf16 %v2077, %v2077
      %v2460 = vpack.c.bf16 %v2092, %v2092
      %v2461 = vpack.c.bf16 %v2107, %v2107
      %v2462 = vpack.c.bf16 %v2122, %v2122
      %v2463 = vpack.c.bf16 %v2137, %v2137
      %v2464 = vpack.c.bf16 %v2152, %v2152
      %v2465 = vpack.c.bf16 %v2167, %v2167
      %v2466 = vpack.c.bf16 %v2182, %v2182
      %v2467 = vpack.c.bf16 %v2197, %v2197
      %v2468 = vpack.c.bf16 %v2212, %v2212
      %v2469 = vpack.c.bf16 %v2227, %v2227
      %v2470 = vpack.c.bf16 %v2242, %v2242
      %v2471 = vpack.c.bf16 %v2257, %v2257
      %v2472 = vpack.c.bf16 %v2272, %v2272
      %v2473 = vpack.c.bf16 %v2287, %v2287
      %v2474 = vpack.c.bf16 %v2302, %v2302
      %v2475 = vpack.c.bf16 %v2317, %v2317
      %v2476 = vpack.c.bf16 %v2332, %v2332
      %v2477 = vpack.c.bf16 %v2347, %v2347
      %v2478 = vpack.c.bf16 %v2362, %v2362
      %v2479 = vpack.c.bf16 %v2377, %v2377
      %v2480 = vpack.c.bf16 %v2392, %v2392
      %v2481 = vpack.c.bf16 %v2407, %v2407
      %v2482 = vpack.c.bf16 %v2422, %v2422
      %v2483 = vpack.c.bf16 %v2437, %v2437
      %v2484 = vpack.c.bf16 %v2452, %v2452
      %2485 = vst [vmem:[%s343] sm:$0xf] %v2453
      %2486 = vst [vmem:[%s343 + $0x4] sm:$0xf] %v2454
      %2487 = vst [vmem:[%s343 + $0x8] sm:$0xf] %v2455
      %2488 = vst [vmem:[%s343 + $0xc] sm:$0xf] %v2456
      %2489 = vst [vmem:[%s343 + $0x10] sm:$0xf] %v2457
      %2490 = vst [vmem:[%s343 + $0x14] sm:$0xf] %v2458
      %2491 = vst [vmem:[%s343 + $0x18] sm:$0xf] %v2459
      %2492 = vst [vmem:[%s343 + $0x1c] sm:$0xf] %v2460
      %2493 = vst [vmem:[%s343 + $0x20] sm:$0xf] %v2461
      %2494 = vst [vmem:[%s343 + $0x24] sm:$0xf] %v2462
      %2495 = vst [vmem:[%s343 + $0x28] sm:$0xf] %v2463
      %2496 = vst [vmem:[%s343 + $0x2c] sm:$0xf] %v2464
      %2497 = vst [vmem:[%s343 + $0x30] sm:$0xf] %v2465
      %2498 = vst [vmem:[%s343 + $0x34] sm:$0xf] %v2466
      %2499 = vst [vmem:[%s343 + $0x38] sm:$0xf] %v2467
      %2500 = vst [vmem:[%s343 + $0x3c] sm:$0xf] %v2468
      %2501 = vst [vmem:[%s343 + $0x40] sm:$0xf] %v2469
      %2502 = vst [vmem:[%s343 + $0x44] sm:$0xf] %v2470
      %2503 = vst [vmem:[%s343 + $0x48] sm:$0xf] %v2471
      %2504 = vst [vmem:[%s343 + $0x4c] sm:$0xf] %v2472
      %2505 = vst [vmem:[%s343 + $0x50] sm:$0xf] %v2473
      %2506 = vst [vmem:[%s343 + $0x54] sm:$0xf] %v2474
      %2507 = vst [vmem:[%s343 + $0x58] sm:$0xf] %v2475
      %2508 = vst [vmem:[%s343 + $0x5c] sm:$0xf] %v2476
      %2509 = vst [vmem:[%s343 + $0x60] sm:$0xf] %v2477
      %2510 = vst [vmem:[%s343 + $0x64] sm:$0xf] %v2478
      %2511 = vst [vmem:[%s343 + $0x68] sm:$0xf] %v2479
      %2512 = vst [vmem:[%s343 + $0x6c] sm:$0xf] %v2480
      %2513 = vst [vmem:[%s343 + $0x70] sm:$0xf] %v2481
      %2514 = vst [vmem:[%s343 + $0x74] sm:$0xf] %v2482
      %2515 = vst [vmem:[%s343 + $0x78] sm:$0xf] %v2483
      %2516 = vst [vmem:[%s343 + $0x7c] sm:$0xf] %v2484
      %s2517 = smul.u32 32, %s20
      %p2518 = scmp.lt.s32.totalorder %s2517, 63
      %s2519 = scalar_select %p2518, %s2517, 63
      %s2520 = smul.addr %s2519, 8
      %s2521 = scalar_lea.vmem %s7, %s2520
      %s2522 = smul.u32 32, %s20
      %p2523 = scmp.lt.s32.totalorder %s2522, 63
      %s2524 = scalar_select %p2523, %s2522, 63
      %s2525 = smul.addr %s2524, 4
      %s2526 = scalar_lea.vmem %s8, %s2525
      // Predicated region
      $region49: #{vae_forward.1} parent=47 // pred_check
        %p2527 = pneg %p195
      $region50: #{vae_forward.1} parent=47 // pred_check_branch
        %2529 = sbr.rel (%p2527) target = $region52
      $region51: #{vae_forward.1} parent=47 // pred_region
        %s2530 = smul.u32 32, %s20
      $region52: #{vae_forward.1} parent=47 // pred_fallthru
        _
      // Predicated region
      $region53: #{vae_forward.1} parent=47 // pred_check
        %p2531 = pneg %p221
      $region54: #{vae_forward.1} parent=47 // pred_check_branch
        %2533 = sbr.rel (%p2531) target = $region56
      $region55: #{vae_forward.1} parent=47 // pred_region
        %s2534 = smul.u32 32, %s20
      $region56: #{vae_forward.1} parent=47 // pred_fallthru
        _
    $region48: #{vae_forward.1} parent=5 // pred_fallthru
      _
    %p2535 = scmp.le.s32.totalorder 2, %s15
    // Predicated region
    $region57: #{vae_forward.1} parent=5 // pred_check
      %p2536 = pneg %p2535
    $region58: #{vae_forward.1} parent=5 // pred_check_branch
      %2538 = sbr.rel (%p2536) target = $region60
    $region59: #{vae_forward.1} parent=5 // pred_region
      %s2539 = ssub.s32 %s15, 2
      // Predicated region
      $region61: #{vae_forward.1} parent=59 // pred_check
        %p2540 = pneg %p201
      $region62: #{vae_forward.1} parent=59 // pred_check_branch
        %2542 = sbr.rel (%p2540) target = $region64
      $region63: #{vae_forward.1} parent=59 // pred_region
        %s2543 = smul.u32 32, %s21
        %p2544 = scmp.lt.s32.totalorder %s2543, 63
        %s2545 = scalar_select %p2544, %s2543, 63
        %s2546 = smul.addr %s2545, 8
        %s2547 = scalar_lea.vmem %s7, %s2546
      $region64: #{vae_forward.1} parent=59 // pred_fallthru
        _
      // Predicated region
      $region65: #{vae_forward.1} parent=59 // pred_check
        %p2548 = pneg %p227
      $region66: #{vae_forward.1} parent=59 // pred_check_branch
        %2550 = sbr.rel (%p2548) target = $region68
      $region67: #{vae_forward.1} parent=59 // pred_region
        %s2551 = smul.u32 32, %s21
        %p2552 = scmp.lt.s32.totalorder %s2551, 63
        %s2553 = scalar_select %p2552, %s2551, 63
        %s2554 = smul.addr %s2553, 4
        %s2555 = scalar_lea.vmem %s8, %s2554
      $region68: #{vae_forward.1} parent=59 // pred_fallthru
        _
    $region60: #{vae_forward.1} parent=5 // pred_fallthru
      _
  $region6: #{vae_forward.1} parent=0 // loop_footer
    %s19 = sadd.s32 1, %s15
  $region7: #{vae_forward.1} parent=0 // loop_footer_branch
    %14 = sbr.rel target = $region3
  $region8: #{vae_forward.1} parent=0 // loop_exit
    _

</llo_original>
